<compile_context>
chip_gen: v7x
topology: tpu7x:2x2x1
jax: 0.10.0
libtpu: 0.0.40
codegen_flags: <defaults>
</compile_context>

<pallas_src>
import jax
import jax.numpy as jnp
from jax.experimental import pallas as pl
from jax.experimental.pallas import tpu as pltpu


def _round_up(n, m):
    return ((n + m - 1) // m) * m


# ----------------------------- Pallas kernels --------------------------------

def _mlp_tail(h, w1_ref, b1_ref, w2_ref, b2_ref, o_ref):
    # h: (TM, H1) f32 pre-activation of layer 0.
    h = jnp.maximum(h, 0.0)
    h = jnp.dot(h.astype(w1_ref.dtype), w1_ref[...],
                preferred_element_type=jnp.float32) + b1_ref[...]
    h = jnp.maximum(h, 0.0)
    h = jnp.dot(h.astype(w2_ref.dtype), w2_ref[...],
                preferred_element_type=jnp.float32) + b2_ref[...]
    o_ref[...] = h.astype(o_ref.dtype)


def _mlp_kernel_per_point(x_ref, f_ref, w0_ref, b0_ref,
                          w1_ref, b1_ref, w2_ref, b2_ref, o_ref):
    # Per-point feature: layer 0 == concat([x, feature]) @ W0 + b0, fused into
    # ONE K=(d_in+F) MXU matmul via an in-register concat (nothing is
    # concatenated in HBM).
    xf = jnp.concatenate([x_ref[...], f_ref[...]], axis=-1)
    h = jnp.dot(xf.astype(w0_ref.dtype), w0_ref[...],
                preferred_element_type=jnp.float32) + b0_ref[...]
    _mlp_tail(h, w1_ref, b1_ref, w2_ref, b2_ref, o_ref)


def _mlp_kernel_shared(x_ref, w0x_ref, b0_ref,
                       w1_ref, b1_ref, w2_ref, b2_ref, o_ref):
    # Shared feature: its layer-0 contribution (feature @ W0_f) is row-
    # invariant and has been folded into b0 on the host, so layer 0 is a
    # single K=d_in matmul.
    h = jnp.dot(x_ref[...].astype(w0x_ref.dtype), w0x_ref[...],
                preferred_element_type=jnp.float32) + b0_ref[...]
    _mlp_tail(h, w1_ref, b1_ref, w2_ref, b2_ref, o_ref)


# ------------------------------ host wrapper ---------------------------------

def _vmem_block_bytes(shape, dtype):
    # Approximate VMEM footprint of one buffer for a block: last dim rounds up
    # to 128 lanes, second-to-last to 8 sublanes.
    shape = tuple(int(s) for s in shape)
    if len(shape) == 1:
        shape = (1,) + shape
    lead = 1
    for d in shape[:-2]:
        lead *= d
    r, c = shape[-2], shape[-1]
    return lead * _round_up(r, 8) * _round_up(c, 128) * jnp.dtype(dtype).itemsize


def displacement_network_forward(x, feature, params, *, tm=256):
    """DisplacementNetwork.forward via one Pallas call.

    x       : (N, d_in) f32 (or bf16 -- consumed directly, no wrapper cast)
    feature : (N, F), or (1, F) / (1, 1, F) shared feature (module's
              feature.repeat, never materialized).
    params  : dict from make_params (weight-normalized, transposed weights).
    Returns (N, d_out_total) f32.
    """
    if feature.ndim != x.ndim:
        feature = jnp.squeeze(feature, axis=0)
    N, d_in = x.shape
    F = feature.shape[-1]
    shared_feature = (feature.shape[0] == 1) and (N != 1)
    assert shared_feature or feature.shape[0] == N, \
        "feature rows must match x rows (or be 1 for a shared feature)"

    w0, w0x, w0f, b0 = params["w0"], params["w0x"], params["w0f"], params["b0"]
    w1, b1 = params["w1"], params["b1"]
    w2, b2 = params["w2"], params["b2"]
    h1, h2 = w1.shape[0], w1.shape[1]
    dout = w2.shape[1]
    assert w0.shape[0] == d_in + F and w0x.shape[0] == d_in and w0f.shape[0] == F

    # Row tile: keep >= 2 grid steps per TensorCore (v7x has 2 TCs) so the
    # software pipeline overlaps DMA with compute; for very large N on
    # v5e/v6e sweep tm upward (1024-2048) to amortize per-step overhead.
    tm = max(8, _round_up(tm, 8))
    tm = min(tm, _round_up(N, 8))
    grid = (pl.cdiv(N, tm),)

    def _full(a):
        return pl.BlockSpec(a.shape, lambda i: (0,) * a.ndim)

    x_spec = pl.BlockSpec((tm, d_in), lambda i: (i, 0))
    out_spec = pl.BlockSpec((tm, dout), lambda i: (i, 0))

    if shared_feature:
        # Fold the row-invariant feature contribution into the layer-0 bias on
        # the host: one 1xF @ FxH1 dot (a few KiB of HBM traffic) replaces a
        # full (tm, F) broadcast + matmul inside the kernel.
        f_row = feature.reshape(1, F)
        b0_eff = b0 + jnp.dot(f_row.astype(w0f.dtype), w0f,
                              preferred_element_type=jnp.float32)
        kernel = _mlp_kernel_shared
        operands = (x, w0x, b0_eff, w1, b1, w2, b2)
        in_specs = [x_spec, _full(w0x), _full(b0_eff),
                    _full(w1), _full(b1), _full(w2), _full(b2)]
        blocks = [((tm, d_in), x.dtype), (w0x.shape, w0x.dtype),
                  (b0_eff.shape, b0_eff.dtype)]
        flops = 2 * N * (d_in * h1 + h1 * h2 + h2 * dout) + 2 * F * h1
    else:
        kernel = _mlp_kernel_per_point
        operands = (x, feature, w0, b0, w1, b1, w2, b2)
        in_specs = [x_spec,
                    pl.BlockSpec((tm, F), lambda i: (i, 0)),
                    _full(w0), _full(b0),
                    _full(w1), _full(b1), _full(w2), _full(b2)]
        blocks = [((tm, d_in), x.dtype), ((tm, F), feature.dtype),
                  (w0.shape, w0.dtype), (b0.shape, b0.dtype)]
        flops = 2 * N * ((d_in + F) * h1 + h1 * h2 + h2 * dout)

    blocks += [(w1.shape, w1.dtype), (b1.shape, b1.dtype),
               (w2.shape, w2.dtype), (b2.shape, b2.dtype),
               ((tm, dout), jnp.float32)]
    # Double-buffered pipeline: 2 buffers per block; grid-invariant blocks are
    # over-counted, which just adds headroom.
    vmem_est = 2 * sum(_vmem_block_bytes(s, d) for s, d in blocks)
    vmem_limit = int(min(max(2 * vmem_est, 16 * 2**20), 40 * 2**20))

    bytes_accessed = (sum(int(a.size) * a.dtype.itemsize for a in operands)
                      + N * dout * 4)
    cost = pl.CostEstimate(flops=int(flops), transcendentals=0,
                           bytes_accessed=int(bytes_accessed))

    return pl.pallas_call(
        kernel,
        out_shape=jax.ShapeDtypeStruct((N, dout), jnp.float32),
        grid_spec=pltpu.PrefetchScalarGridSpec(
            num_scalar_prefetch=0,
            grid=grid,
            in_specs=in_specs,
            out_specs=out_spec,
        ),
        compiler_params=pltpu.CompilerParams(
            dimension_semantics=("parallel",),
            vmem_limit_bytes=vmem_limit),
        cost_estimate=cost,
    )(*operands)


# ------------------------- parameter construction ---------------------------

def _weight_norm(v, g):
    # torch.nn.utils.weight_norm (dim=0) on a Linear weight v of shape
    # (out, in): w = g * v / ||v||_2, norm per output row.  No eps, matching
    # torch exactly (random init never produces a zero row).
    norm = jnp.sqrt(jnp.sum(v * v, axis=1, keepdims=True))
    return g * v / norm


def make_params(key, d_in, in_feature_dim, hidden_dims, d_out_total,
                mm_dtype=jnp.bfloat16):
    """Weight-normalized params, transposed to (in, out).

    Weights stored in `mm_dtype` (bf16 default for MXU-native operands; pass
    jnp.float32 if the displacement consumer needs tighter accuracy -- the
    kernel is memory bound, so f32 matmuls are nearly free).  Biases are f32.
    Layer-0 weight is stored joined ((d_in+F, H1), for the fused per-point
    kernel) and split (w0x/w0f, for the shared-feature host bias fold).  The
    last layer is NOT lane-padded: its width equals the output array's last
    dim, halving the output writeback vs. a 128-lane slab.
    """
    assert len(hidden_dims) == 2, "this kernel implements the 3-layer config"
    dims_list = [d_in + in_feature_dim] + list(hidden_dims) + [d_out_total]
    ws, bs = [], []
    for l in range(len(dims_list) - 1):
        din, dout = dims_list[l], dims_list[l + 1]
        key, kv, kg, kb = jax.random.split(key, 4)
        v = jax.random.normal(kv, (dout, din), jnp.float32) * 0.1   # (out, in)
        g = jax.random.normal(kg, (dout, 1), jnp.float32) * 0.1 + 1.0
        b = jax.random.normal(kb, (dout,), jnp.float32) * 0.01
        ws.append(_weight_norm(v, g).T.astype(mm_dtype))    # (in, out)
        bs.append(b[None, :].astype(jnp.float32))            # (1, out)

    return {
        "w0": ws[0],                  # (d_in + F, H1)  joined
        "w0x": ws[0][:d_in],          # (d_in, H1)
        "w0f": ws[0][d_in:],          # (F,    H1)
        "b0": bs[0],
        "w1": ws[1],                  # (H1, H2)
        "b1": bs[1],
        "w2": ws[2],                  # (H2, d_out_total)  -- no lane pad
        "b2": bs[2],                  # (1,  d_out_total)
        "d_out": d_out_total,
    }


# ------------------------------- references ---------------------------------

def _bcast_feature(x, feature):
    if feature.ndim != x.ndim:
        feature = jnp.squeeze(feature, axis=0)
    if x.shape[0] != feature.shape[0] and feature.shape[0] == 1:
        feature = jnp.broadcast_to(feature, (x.shape[0], feature.shape[1]))
    return feature


def reference_forward_mirrored(x, feature, params):
    """Pure-JAX replica of the kernel math (mm_dtype operands, f32 accum)."""
    feature = _bcast_feature(x, feature)
    mm = params["w1"].dtype
    dot = lambda a, w: jnp.dot(a.astype(mm), w,
                               preferred_element_type=jnp.float32)
    h = dot(jnp.concatenate([x, feature], axis=-1), params["w0"]) + params["b0"]
    h = jnp.maximum(h, 0.0)
    h = dot(h, params["w1"]) + params["b1"]
    h = jnp.maximum(h, 0.0)
    h = dot(h, params["w2"]) + params["b2"]
    return h


def reference_forward_f32(x, feature, params):
    """Module semantics (concat + 3 Linear layers) in f32 on stored weights."""
    feature = _bcast_feature(x, feature)
    f32 = jnp.float32
    h = jnp.concatenate([x, feature], axis=-1).astype(f32)
    h = jnp.maximum(h @ params["w0"].astype(f32) + params["b0"], 0.0)
    h = jnp.maximum(h @ params["w1"].astype(f32) + params["b1"], 0.0)
    h = h @ params["w2"].astype(f32) + params["b2"]
    return h


# ---------------------------------- main -------------------------------------

if __name__ == "__main__":
    # Module configuration (small, deterministic):
    d_in = 3
    in_feature_dim = 29          # -> fused layer-0 K = 32
    hidden_dims = [64, 64]
    d_out = 1
    displace_feature_dim = 63    # -> d_out_total = 64 (full output lane width)
    d_out_total = d_out + displace_feature_dim

    N = 1000   # not a multiple of the tile -> exercises the ragged last tile

    key = jax.random.PRNGKey(0)
    key, kx, kf, kfs = jax.random.split(key, 4)
    x = jax.random.normal(kx, (N, d_in), jnp.float32)
    feature = jax.random.normal(kf, (N, in_feature_dim), jnp.float32)
    shared_feature = jax.random.normal(kfs, (1, 1, in_feature_dim), jnp.float32)

    params = make_params(key, d_in, in_feature_dim, hidden_dims, d_out_total)

    # --- per-point feature path (tm=256 -> grid=(4,): 2 steps/TC on v7x) -----
    out = displacement_network_forward(x, feature, params, tm=256)
    out = jax.block_until_ready(out)
    assert out.shape == (N, d_out_total)

    ref_mirror = reference_forward_mirrored(x, feature, params)
    assert jnp.allclose(out, ref_mirror, atol=1e-3, rtol=1e-3), \
        "kernel vs mirrored (bf16-operand) reference mismatch"
    ref_f32 = reference_forward_f32(x, feature, params)
    assert jnp.allclose(out, ref_f32, atol=1e-1, rtol=5e-2), \
        "kernel vs f32 module-semantics reference mismatch"

    # --- shared feature path (module's feature.repeat, without broadcast) ----
    out_s = displacement_network_forward(x, shared_feature, params, tm=256)
    out_s = jax.block_until_ready(out_s)
    ref_s = reference_forward_mirrored(x, shared_feature, params)
    assert jnp.allclose(out_s, ref_s, atol=1e-3, rtol=1e-3), \
        "shared-feature path mismatch"

    # TODO(synk): multires>0 (positional embedder), skip_in concat, and the
    # use_feature=False / x=None branches are module-config options unused at
    # these defaults; not implemented here.
    print("KERNEL_OK")
</pallas_src>

<mosaic_0001>
module attributes {stable_mosaic.version = 11 : i64} {
  func.func @_mlp_kernel_per_point(%arg0: i32, %arg1: memref<256x3xf32, #tpu.memory_space<vmem>>, %arg2: memref<256x29xf32, #tpu.memory_space<vmem>>, %arg3: memref<32x64xbf16, #tpu.memory_space<vmem>>, %arg4: memref<1x64xf32, #tpu.memory_space<vmem>>, %arg5: memref<64x64xbf16, #tpu.memory_space<vmem>>, %arg6: memref<1x64xf32, #tpu.memory_space<vmem>>, %arg7: memref<64x64xbf16, #tpu.memory_space<vmem>>, %arg8: memref<1x64xf32, #tpu.memory_space<vmem>>, %arg9: memref<256x64xf32, #tpu.memory_space<vmem>>) attributes {dimension_semantics = [#tpu.dimension_semantics<parallel>], iteration_bounds = array<i64: 4>, scalar_prefetch = 0 : i64, scratch_operands = 0 : i64, tpu.core_type = #tpu.core_type<tc>, window_params = [{transform_indices = @transform_0, window_bounds = array<i64: 256, 3>}, {transform_indices = @transform_1, window_bounds = array<i64: 256, 29>}, {pipeline_mode = #tpu.pipeline_mode<synchronous>, transform_indices = @transform_2, window_bounds = array<i64: 32, 64>}, {pipeline_mode = #tpu.pipeline_mode<synchronous>, transform_indices = @transform_3, window_bounds = array<i64: 1, 64>}, {pipeline_mode = #tpu.pipeline_mode<synchronous>, transform_indices = @transform_4, window_bounds = array<i64: 64, 64>}, {pipeline_mode = #tpu.pipeline_mode<synchronous>, transform_indices = @transform_5, window_bounds = array<i64: 1, 64>}, {pipeline_mode = #tpu.pipeline_mode<synchronous>, transform_indices = @transform_6, window_bounds = array<i64: 64, 64>}, {pipeline_mode = #tpu.pipeline_mode<synchronous>, transform_indices = @transform_7, window_bounds = array<i64: 1, 64>}, {transform_indices = @transform_8, window_bounds = array<i64: 256, 64>}]} {
    %c0 = arith.constant 0 : index
    %c0_0 = arith.constant 0 : index
    %0 = vector.load %arg1[%c0, %c0_0] : memref<256x3xf32, #tpu.memory_space<vmem>>, vector<256x3xf32>
    %c0_1 = arith.constant 0 : index
    %c0_2 = arith.constant 0 : index
    %1 = vector.load %arg2[%c0_1, %c0_2] : memref<256x29xf32, #tpu.memory_space<vmem>>, vector<256x29xf32>
    %2 = tpu.concatenate %0, %1 in 1 : vector<256x3xf32>, vector<256x29xf32> -> vector<256x32xf32>
    %3 = arith.truncf %2 : vector<256x32xf32> to vector<256x32xbf16>
    %c0_3 = arith.constant 0 : index
    %c0_4 = arith.constant 0 : index
    %4 = vector.load %arg3[%c0_3, %c0_4] : memref<32x64xbf16, #tpu.memory_space<vmem>>, vector<32x64xbf16>
    %cst = arith.constant dense<0.000000e+00> : vector<256x64xf32>
    %5 = tpu.matmul %3, %4, %cst {dimension_numbers = #tpu.dot_dimension_numbers<[1], [0], [0], [1], [0, 0, 1, 1], [], []>} : vector<256x32xbf16>, vector<32x64xbf16>, vector<256x64xf32> -> vector<256x64xf32>
    %c0_5 = arith.constant 0 : index
    %c0_6 = arith.constant 0 : index
    %6 = vector.load %arg4[%c0_5, %c0_6] : memref<1x64xf32, #tpu.memory_space<vmem>>, vector<1x64xf32>
    %7 = vector.broadcast %6 : vector<1x64xf32> to vector<256x64xf32>
    %8 = arith.addf %5, %7 : vector<256x64xf32>
    %cst_7 = arith.constant 0.000000e+00 : f32
    %9 = vector.broadcast %cst_7 : f32 to vector<256x64xf32>
    %10 = arith.maximumf %8, %9 : vector<256x64xf32>
    %11 = arith.truncf %10 : vector<256x64xf32> to vector<256x64xbf16>
    %c0_8 = arith.constant 0 : index
    %c0_9 = arith.constant 0 : index
    %12 = vector.load %arg5[%c0_8, %c0_9] : memref<64x64xbf16, #tpu.memory_space<vmem>>, vector<64x64xbf16>
    %cst_10 = arith.constant dense<0.000000e+00> : vector<256x64xf32>
    %13 = tpu.matmul %11, %12, %cst_10 {dimension_numbers = #tpu.dot_dimension_numbers<[1], [0], [0], [1], [0, 0, 1, 1], [], []>} : vector<256x64xbf16>, vector<64x64xbf16>, vector<256x64xf32> -> vector<256x64xf32>
    %c0_11 = arith.constant 0 : index
    %c0_12 = arith.constant 0 : index
    %14 = vector.load %arg6[%c0_11, %c0_12] : memref<1x64xf32, #tpu.memory_space<vmem>>, vector<1x64xf32>
    %15 = vector.broadcast %14 : vector<1x64xf32> to vector<256x64xf32>
    %16 = arith.addf %13, %15 : vector<256x64xf32>
    %cst_13 = arith.constant 0.000000e+00 : f32
    %17 = vector.broadcast %cst_13 : f32 to vector<256x64xf32>
    %18 = arith.maximumf %16, %17 : vector<256x64xf32>
    %19 = arith.truncf %18 : vector<256x64xf32> to vector<256x64xbf16>
    %c0_14 = arith.constant 0 : index
    %c0_15 = arith.constant 0 : index
    %20 = vector.load %arg7[%c0_14, %c0_15] : memref<64x64xbf16, #tpu.memory_space<vmem>>, vector<64x64xbf16>
    %cst_16 = arith.constant dense<0.000000e+00> : vector<256x64xf32>
    %21 = tpu.matmul %19, %20, %cst_16 {dimension_numbers = #tpu.dot_dimension_numbers<[1], [0], [0], [1], [0, 0, 1, 1], [], []>} : vector<256x64xbf16>, vector<64x64xbf16>, vector<256x64xf32> -> vector<256x64xf32>
    %c0_17 = arith.constant 0 : index
    %c0_18 = arith.constant 0 : index
    %22 = vector.load %arg8[%c0_17, %c0_18] : memref<1x64xf32, #tpu.memory_space<vmem>>, vector<1x64xf32>
    %23 = vector.broadcast %22 : vector<1x64xf32> to vector<256x64xf32>
    %24 = arith.addf %21, %23 : vector<256x64xf32>
    %c0_19 = arith.constant 0 : index
    %c0_20 = arith.constant 0 : index
    %25 = vector.load %arg9[%c0_19, %c0_20] : memref<256x64xf32, #tpu.memory_space<vmem>>, vector<256x64xf32>
    tpu.vector_store %arg9[%c0_19, %c0_20], %24 {strides = array<i32>} : memref<256x64xf32, #tpu.memory_space<vmem>>, vector<256x64xf32>,
    return
  }
  func.func @transform_0(%arg0: i32) -> (i32, i32) {
    %c0_i32 = arith.constant 0 : i32
    %c0_i32_0 = arith.constant 0 : i32
    return %arg0, %c0_i32 : i32, i32
  }
  func.func @transform_1(%arg0: i32) -> (i32, i32) {
    %c0_i32 = arith.constant 0 : i32
    %c0_i32_0 = arith.constant 0 : i32
    return %arg0, %c0_i32 : i32, i32
  }
  func.func @transform_2(%arg0: i32) -> (i32, i32) {
    %c0_i32 = arith.constant 0 : i32
    %c0_i32_0 = arith.constant 0 : i32
    %c0_i32_1 = arith.constant 0 : i32
    return %c0_i32, %c0_i32_0 : i32, i32
  }
  func.func @transform_3(%arg0: i32) -> (i32, i32) {
    %c0_i32 = arith.constant 0 : i32
    %c0_i32_0 = arith.constant 0 : i32
    %c0_i32_1 = arith.constant 0 : i32
    return %c0_i32, %c0_i32_0 : i32, i32
  }
  func.func @transform_4(%arg0: i32) -> (i32, i32) {
    %c0_i32 = arith.constant 0 : i32
    %c0_i32_0 = arith.constant 0 : i32
    %c0_i32_1 = arith.constant 0 : i32
    return %c0_i32, %c0_i32_0 : i32, i32
  }
  func.func @transform_5(%arg0: i32) -> (i32, i32) {
    %c0_i32 = arith.constant 0 : i32
    %c0_i32_0 = arith.constant 0 : i32
    %c0_i32_1 = arith.constant 0 : i32
    return %c0_i32, %c0_i32_0 : i32, i32
  }
  func.func @transform_6(%arg0: i32) -> (i32, i32) {
    %c0_i32 = arith.constant 0 : i32
    %c0_i32_0 = arith.constant 0 : i32
    %c0_i32_1 = arith.constant 0 : i32
    return %c0_i32, %c0_i32_0 : i32, i32
  }
  func.func @transform_7(%arg0: i32) -> (i32, i32) {
    %c0_i32 = arith.constant 0 : i32
    %c0_i32_0 = arith.constant 0 : i32
    %c0_i32_1 = arith.constant 0 : i32
    return %c0_i32, %c0_i32_0 : i32, i32
  }
  func.func @transform_8(%arg0: i32) -> (i32, i32) {
    %c0_i32 = arith.constant 0 : i32
    %c0_i32_0 = arith.constant 0 : i32
    return %arg0, %c0_i32 : i32, i32
  }
}

</mosaic_0001>

<llo_original>
// kernel: tpu_custom_call.1
$region0: #{tpu_custom_call.1}
  #allocation0 [shape = 'u32[]', space=smem, size = 0x4, offset = 0x4, fixed_abs, tag = 'smem constant byte address 0x4 - core index']
  #allocation1 [shape = 'u32[144,128]{1,0:T(1,128)}', space=vmem, size = 0x12000, scoped, tag = 'internal scratch']
  %s0 = inlined_call_operand.vmem [shape: f32[1000,3], index: 0, kind: input, shape index: {}]
  %s1 = inlined_call_operand.vmem [shape: f32[1000,29], index: 1, kind: input, shape index: {}]
  %s2 = inlined_call_operand.vmem [shape: bf16[32,64], index: 2, kind: input, shape index: {}]
  %s3 = inlined_call_operand.vmem [shape: f32[1,64], index: 3, kind: input, shape index: {}]
  %s4 = inlined_call_operand.vmem [shape: bf16[64,64], index: 4, kind: input, shape index: {}]
  %s5 = inlined_call_operand.vmem [shape: f32[1,64], index: 5, kind: input, shape index: {}]
  %s6 = inlined_call_operand.vmem [shape: bf16[64,64], index: 6, kind: input, shape index: {}]
  %s7 = inlined_call_operand.vmem [shape: f32[1,64], index: 7, kind: input, shape index: {}]
  %s8 = inlined_call_operand.vmem [shape: f32[1000,64], index: 8, kind: output, shape index: {}]
  %s9 = sld [smem:[#allocation0]]
  $region113: #{tpu_custom_call.1} parent=0
    _
  %s11 = ssub.s32 1, %s9
  %s12 = scalar_select 0, %s11, %s9
  $region1: #{tpu_custom_call.1} parent=0
    #allocation2 [shape = 'u8[262144]{0}', space=vmem, size = 0x40000, scoped, tag = 'output window, operand 0']
    loop: start=0, step=1, limit=6
    $region2: #{tpu_custom_call.1} parent=1 // loop_pre_header
      _
    $region3: #{tpu_custom_call.1} parent=1 // loop_header
      %s14 = sphi 0, %s18
      %p15 = scmp.ge.s32.totalorder %s14, 6
      %s24 = sphi 0, %s26
      %s27 = sphi 0, %s24
      %s28 = sphi 0, %s27
      %s44 = sphi 0, %s28
      %s50 = sphi 0, %s52
      %s53 = sphi 0, %s50
      %s54 = sphi 0, %s53
      %s70 = sphi 0, %s54
      %s74 = sphi 0, %s74
      %s76 = sphi 0, %s74
      %s77 = sphi 0, %s76
      %s91 = sphi 0, %s77
      %s95 = sphi 0, %s95
      %s97 = sphi 0, %s95
      %s98 = sphi 0, %s97
      %s112 = sphi 0, %s98
      %s116 = sphi 0, %s116
      %s118 = sphi 0, %s116
      %s119 = sphi 0, %s118
      %s133 = sphi 0, %s119
      %s137 = sphi 0, %s137
      %s139 = sphi 0, %s137
      %s140 = sphi 0, %s139
      %s154 = sphi 0, %s140
      %s158 = sphi 0, %s158
      %s160 = sphi 0, %s158
      %s161 = sphi 0, %s160
      %s175 = sphi 0, %s161
      %s179 = sphi 0, %s179
      %s181 = sphi 0, %s179
      %s182 = sphi 0, %s181
      %s196 = sphi 0, %s182
      %s202 = sphi 0, %s204
      %s205 = sphi 0, %s202
      %s206 = sphi 0, %s205
      %s222 = sphi 0, %s206
    $region4: #{tpu_custom_call.1} parent=1 // loop_header_branch
      %17 = sbr.rel (%p15) target = $region8
    $region5: #{tpu_custom_call.1} parent=1 // loop_body
      %s19 = ssub.s32 %s14, 1
      %s20 = ssub.s32 %s14, 2
      %s21 = sadd.s32 %s14, 1
      %s22 = ssub.s32 %s14, %s21
      %p23 = scmp.eq.s32.totalorder %s22, 0
      %s25 = sadd.s32 %s24, 1
      %s26 = scalar_select %p23, %s24, %s25
      %p29 = pneg %p23
      %p30 = scmp.eq.s32.totalorder %s14, 3
      %p31 = por %p29, %p30
      %p32 = scmp.ne.s32.totalorder %s24, %s27
      %p33 = scmp.eq.s32.totalorder %s14, 0
      %p34 = por %p32, %p33
      %p35 = scmp.ne.s32.totalorder %s24, %s27
      %p36 = scmp.eq.s32.totalorder %s19, 3
      %p37 = por %p35, %p36
      %p38 = scmp.ne.s32.totalorder %s27, %s28
      %p39 = scmp.eq.s32.totalorder %s19, 0
      %p40 = por %p38, %p39
      %p41 = scmp.ne.s32.totalorder %s27, %s28
      %p42 = scmp.eq.s32.totalorder %s20, 3
      %p43 = por %p41, %p42
      %p45 = scmp.ne.s32.totalorder %s28, %s44
      %p46 = scmp.eq.s32.totalorder %s20, 0
      %p47 = por %p45, %p46
      %s48 = ssub.s32 %s14, %s21
      %p49 = scmp.eq.s32.totalorder %s48, 0
      %s51 = sadd.s32 %s50, 1
      %s52 = scalar_select %p49, %s50, %s51
      %p55 = pneg %p49
      %p56 = scmp.eq.s32.totalorder %s14, 3
      %p57 = por %p55, %p56
      %p58 = scmp.ne.s32.totalorder %s50, %s53
      %p59 = scmp.eq.s32.totalorder %s14, 0
      %p60 = por %p58, %p59
      %p61 = scmp.ne.s32.totalorder %s50, %s53
      %p62 = scmp.eq.s32.totalorder %s19, 3
      %p63 = por %p61, %p62
      %p64 = scmp.ne.s32.totalorder %s53, %s54
      %p65 = scmp.eq.s32.totalorder %s19, 0
      %p66 = por %p64, %p65
      %p67 = scmp.ne.s32.totalorder %s53, %s54
      %p68 = scmp.eq.s32.totalorder %s20, 3
      %p69 = por %p67, %p68
      %p71 = scmp.ne.s32.totalorder %s54, %s70
      %p72 = scmp.eq.s32.totalorder %s20, 0
      %p73 = por %p71, %p72
      %s75 = sadd.s32 %s74, 1
      %p78 = scmp.eq.s32.totalorder %s14, 3
      %p79 = scmp.ne.s32.totalorder %s74, %s76
      %p80 = scmp.eq.s32.totalorder %s14, 0
      %p81 = por %p79, %p80
      %p82 = scmp.ne.s32.totalorder %s74, %s76
      %p83 = scmp.eq.s32.totalorder %s19, 3
      %p84 = por %p82, %p83
      %p85 = scmp.ne.s32.totalorder %s76, %s77
      %p86 = scmp.eq.s32.totalorder %s19, 0
      %p87 = por %p85, %p86
      %p88 = scmp.ne.s32.totalorder %s76, %s77
      %p89 = scmp.eq.s32.totalorder %s20, 3
      %p90 = por %p88, %p89
      %p92 = scmp.ne.s32.totalorder %s77, %s91
      %p93 = scmp.eq.s32.totalorder %s20, 0
      %p94 = por %p92, %p93
      %s96 = sadd.s32 %s95, 1
      %p99 = scmp.eq.s32.totalorder %s14, 3
      %p100 = scmp.ne.s32.totalorder %s95, %s97
      %p101 = scmp.eq.s32.totalorder %s14, 0
      %p102 = por %p100, %p101
      %p103 = scmp.ne.s32.totalorder %s95, %s97
      %p104 = scmp.eq.s32.totalorder %s19, 3
      %p105 = por %p103, %p104
      %p106 = scmp.ne.s32.totalorder %s97, %s98
      %p107 = scmp.eq.s32.totalorder %s19, 0
      %p108 = por %p106, %p107
      %p109 = scmp.ne.s32.totalorder %s97, %s98
      %p110 = scmp.eq.s32.totalorder %s20, 3
      %p111 = por %p109, %p110
      %p113 = scmp.ne.s32.totalorder %s98, %s112
      %p114 = scmp.eq.s32.totalorder %s20, 0
      %p115 = por %p113, %p114
      %s117 = sadd.s32 %s116, 1
      %p120 = scmp.eq.s32.totalorder %s14, 3
      %p121 = scmp.ne.s32.totalorder %s116, %s118
      %p122 = scmp.eq.s32.totalorder %s14, 0
      %p123 = por %p121, %p122
      %p124 = scmp.ne.s32.totalorder %s116, %s118
      %p125 = scmp.eq.s32.totalorder %s19, 3
      %p126 = por %p124, %p125
      %p127 = scmp.ne.s32.totalorder %s118, %s119
      %p128 = scmp.eq.s32.totalorder %s19, 0
      %p129 = por %p127, %p128
      %p130 = scmp.ne.s32.totalorder %s118, %s119
      %p131 = scmp.eq.s32.totalorder %s20, 3
      %p132 = por %p130, %p131
      %p134 = scmp.ne.s32.totalorder %s119, %s133
      %p135 = scmp.eq.s32.totalorder %s20, 0
      %p136 = por %p134, %p135
      %s138 = sadd.s32 %s137, 1
      %p141 = scmp.eq.s32.totalorder %s14, 3
      %p142 = scmp.ne.s32.totalorder %s137, %s139
      %p143 = scmp.eq.s32.totalorder %s14, 0
      %p144 = por %p142, %p143
      %p145 = scmp.ne.s32.totalorder %s137, %s139
      %p146 = scmp.eq.s32.totalorder %s19, 3
      %p147 = por %p145, %p146
      %p148 = scmp.ne.s32.totalorder %s139, %s140
      %p149 = scmp.eq.s32.totalorder %s19, 0
      %p150 = por %p148, %p149
      %p151 = scmp.ne.s32.totalorder %s139, %s140
      %p152 = scmp.eq.s32.totalorder %s20, 3
      %p153 = por %p151, %p152
      %p155 = scmp.ne.s32.totalorder %s140, %s154
      %p156 = scmp.eq.s32.totalorder %s20, 0
      %p157 = por %p155, %p156
      %s159 = sadd.s32 %s158, 1
      %p162 = scmp.eq.s32.totalorder %s14, 3
      %p163 = scmp.ne.s32.totalorder %s158, %s160
      %p164 = scmp.eq.s32.totalorder %s14, 0
      %p165 = por %p163, %p164
      %p166 = scmp.ne.s32.totalorder %s158, %s160
      %p167 = scmp.eq.s32.totalorder %s19, 3
      %p168 = por %p166, %p167
      %p169 = scmp.ne.s32.totalorder %s160, %s161
      %p170 = scmp.eq.s32.totalorder %s19, 0
      %p171 = por %p169, %p170
      %p172 = scmp.ne.s32.totalorder %s160, %s161
      %p173 = scmp.eq.s32.totalorder %s20, 3
      %p174 = por %p172, %p173
      %p176 = scmp.ne.s32.totalorder %s161, %s175
      %p177 = scmp.eq.s32.totalorder %s20, 0
      %p178 = por %p176, %p177
      %s180 = sadd.s32 %s179, 1
      %p183 = scmp.eq.s32.totalorder %s14, 3
      %p184 = scmp.ne.s32.totalorder %s179, %s181
      %p185 = scmp.eq.s32.totalorder %s14, 0
      %p186 = por %p184, %p185
      %p187 = scmp.ne.s32.totalorder %s179, %s181
      %p188 = scmp.eq.s32.totalorder %s19, 3
      %p189 = por %p187, %p188
      %p190 = scmp.ne.s32.totalorder %s181, %s182
      %p191 = scmp.eq.s32.totalorder %s19, 0
      %p192 = por %p190, %p191
      %p193 = scmp.ne.s32.totalorder %s181, %s182
      %p194 = scmp.eq.s32.totalorder %s20, 3
      %p195 = por %p193, %p194
      %p197 = scmp.ne.s32.totalorder %s182, %s196
      %p198 = scmp.eq.s32.totalorder %s20, 0
      %p199 = por %p197, %p198
      %s200 = ssub.s32 %s14, %s21
      %p201 = scmp.eq.s32.totalorder %s200, 0
      %s203 = sadd.s32 %s202, 1
      %s204 = scalar_select %p201, %s202, %s203
      %p207 = pneg %p201
      %p208 = scmp.eq.s32.totalorder %s14, 3
      %p209 = por %p207, %p208
      %p210 = scmp.ne.s32.totalorder %s202, %s205
      %p211 = scmp.eq.s32.totalorder %s14, 0
      %p212 = por %p210, %p211
      %p213 = scmp.ne.s32.totalorder %s202, %s205
      %p214 = scmp.eq.s32.totalorder %s19, 3
      %p215 = por %p213, %p214
      %p216 = scmp.ne.s32.totalorder %s205, %s206
      %p217 = scmp.eq.s32.totalorder %s19, 0
      %p218 = por %p216, %p217
      %p219 = scmp.ne.s32.totalorder %s205, %s206
      %p220 = scmp.eq.s32.totalorder %s20, 3
      %p221 = por %p219, %p220
      %p223 = scmp.ne.s32.totalorder %s206, %s222
      %p224 = scmp.eq.s32.totalorder %s20, 0
      %p225 = por %p223, %p224
      %p226 = scmp.le.s32.totalorder 1, %s14
      %p227 = scmp.lt.s32.totalorder %s14, 5
      %p228 = pnand %p226, %p227
      %p229 = pneg %p228
      // Predicated region
      $region9: #{tpu_custom_call.1} parent=5 // pred_check
        _
      $region10: #{tpu_custom_call.1} parent=5 // pred_check_branch
        %231 = sbr.rel (%p228) target = $region12
      $region11: #{tpu_custom_call.1} parent=5 // pred_region
        %s232 = ssub.s32 %s14, 1
        // Predicated region
        $region13: #{tpu_custom_call.1} parent=11 // pred_check
          %p233 = pneg %p87
        $region14: #{tpu_custom_call.1} parent=11 // pred_check_branch
          %235 = sbr.rel (%p233) target = $region16
        $region15: #{tpu_custom_call.1} parent=11 // pred_region
          _
        $region16: #{tpu_custom_call.1} parent=11 // pred_fallthru
          _
        // Predicated region
        $region17: #{tpu_custom_call.1} parent=11 // pred_check
          %p236 = pneg %p108
        $region18: #{tpu_custom_call.1} parent=11 // pred_check_branch
          %238 = sbr.rel (%p236) target = $region20
        $region19: #{tpu_custom_call.1} parent=11 // pred_region
          _
        $region20: #{tpu_custom_call.1} parent=11 // pred_fallthru
          _
        // Predicated region
        $region21: #{tpu_custom_call.1} parent=11 // pred_check
          %p239 = pneg %p129
        $region22: #{tpu_custom_call.1} parent=11 // pred_check_branch
          %241 = sbr.rel (%p239) target = $region24
        $region23: #{tpu_custom_call.1} parent=11 // pred_region
          _
        $region24: #{tpu_custom_call.1} parent=11 // pred_fallthru
          _
        // Predicated region
        $region25: #{tpu_custom_call.1} parent=11 // pred_check
          %p242 = pneg %p150
        $region26: #{tpu_custom_call.1} parent=11 // pred_check_branch
          %244 = sbr.rel (%p242) target = $region28
        $region27: #{tpu_custom_call.1} parent=11 // pred_region
          _
        $region28: #{tpu_custom_call.1} parent=11 // pred_fallthru
          _
        // Predicated region
        $region29: #{tpu_custom_call.1} parent=11 // pred_check
          %p245 = pneg %p171
        $region30: #{tpu_custom_call.1} parent=11 // pred_check_branch
          %247 = sbr.rel (%p245) target = $region32
        $region31: #{tpu_custom_call.1} parent=11 // pred_region
          _
        $region32: #{tpu_custom_call.1} parent=11 // pred_fallthru
          _
        // Predicated region
        $region33: #{tpu_custom_call.1} parent=11 // pred_check
          %p248 = pneg %p192
        $region34: #{tpu_custom_call.1} parent=11 // pred_check_branch
          %250 = sbr.rel (%p248) target = $region36
        $region35: #{tpu_custom_call.1} parent=11 // pred_region
          _
        $region36: #{tpu_custom_call.1} parent=11 // pred_fallthru
          _
      $region12: #{tpu_custom_call.1} parent=5 // pred_fallthru
        _
      %p251 = scmp.lt.s32.totalorder %s14, 4
      // Predicated region
      $region37: #{tpu_custom_call.1} parent=5 // pred_check
        %p252 = pneg %p251
      $region38: #{tpu_custom_call.1} parent=5 // pred_check_branch
        %254 = sbr.rel (%p252) target = $region40
      $region39: #{tpu_custom_call.1} parent=5 // pred_region
        // Predicated region
        $region41: #{tpu_custom_call.1} parent=39 // pred_check
          %p255 = pneg %p34
        $region42: #{tpu_custom_call.1} parent=39 // pred_check_branch
          %257 = sbr.rel (%p255) target = $region44
        $region43: #{tpu_custom_call.1} parent=39 // pred_region
          %s258 = smul.u32 32, %s14
          %s259 = ssub.s32 125, %s258
          %p260 = scmp.lt.s32.totalorder %s259, 32
          %s261 = scalar_select %p260, %s259, 32
          %s262 = smul.u32 128, %s261
          %p263 = scmp.lt.s32.totalorder %s258, 124
          %s264 = scalar_select %p263, %s258, 124
          %s265 = smul.addr %s264, 8
          %s266 = scalar_lea.vmem %s0, %s265
          %s267 = smul.u32 32, %s14
          %s268 = ssub.s32 125, %s267
          %p269 = scmp.lt.s32.totalorder %s268, 32
          %s270 = scalar_select %p269, %s268, 32
          %s271 = smul.u32 128, %s270
        $region44: #{tpu_custom_call.1} parent=39 // pred_fallthru
          _
        // Predicated region
        $region45: #{tpu_custom_call.1} parent=39 // pred_check
          %p272 = pneg %p60
        $region46: #{tpu_custom_call.1} parent=39 // pred_check_branch
          %274 = sbr.rel (%p272) target = $region48
        $region47: #{tpu_custom_call.1} parent=39 // pred_region
          %s275 = smul.u32 32, %s14
          %s276 = ssub.s32 125, %s275
          %p277 = scmp.lt.s32.totalorder %s276, 32
          %s278 = scalar_select %p277, %s276, 32
          %s279 = smul.u32 128, %s278
          %p280 = scmp.lt.s32.totalorder %s275, 124
          %s281 = scalar_select %p280, %s275, 124
          %s282 = smul.addr %s281, 8
          %s283 = scalar_lea.vmem %s1, %s282
          %s284 = smul.u32 32, %s14
          %s285 = ssub.s32 125, %s284
          %p286 = scmp.lt.s32.totalorder %s285, 32
          %s287 = scalar_select %p286, %s285, 32
          %s288 = smul.u32 128, %s287
        $region48: #{tpu_custom_call.1} parent=39 // pred_fallthru
          _
      $region40: #{tpu_custom_call.1} parent=5 // pred_fallthru
        _
      %p289 = scmp.le.s32.totalorder 1, %s14
      %p290 = scmp.lt.s32.totalorder %s14, 5
      %p291 = pnand %p289, %p290
      %p292 = pneg %p291
      // Predicated region
      $region49: #{tpu_custom_call.1} parent=5 // pred_check
        _
      $region50: #{tpu_custom_call.1} parent=5 // pred_check_branch
        %294 = sbr.rel (%p291) target = $region52
      $region51: #{tpu_custom_call.1} parent=5 // pred_region
        %s295 = ssub.s32 %s14, 1
        %s296 = smul.u32 32, %s19
        %s297 = ssub.s32 125, %s296
        %p298 = scmp.lt.s32.totalorder %s297, 32
        %s299 = scalar_select %p298, %s297, 32
        %s300 = smul.u32 128, %s299
        %p301 = scmp.lt.s32.totalorder %s296, 124
        %s302 = scalar_select %p301, %s296, 124
        %s303 = smul.addr %s302, 8
        %s304 = scalar_lea.vmem %s0, %s303
        %p305 = pneg %p40
        %p306 = pneg %p37
        %s307 = smul.u32 32, %s19
        %s308 = ssub.s32 125, %s307
        %p309 = scmp.lt.s32.totalorder %s308, 32
        %s310 = scalar_select %p309, %s308, 32
        %s311 = smul.u32 128, %s310
        %p312 = scmp.lt.s32.totalorder %s307, 124
        %s313 = scalar_select %p312, %s307, 124
        %s314 = smul.addr %s313, 8
        %s315 = scalar_lea.vmem %s1, %s314
        %p316 = pneg %p66
        %p317 = pneg %p63
        %p318 = pneg %p87
        %p319 = pneg %p84
        %p320 = pneg %p108
        %p321 = pneg %p105
        %p322 = pneg %p129
        %p323 = pneg %p126
        %p324 = pneg %p150
        %p325 = pneg %p147
        %p326 = pneg %p171
        %p327 = pneg %p168
        %p328 = pneg %p192
        %p329 = pneg %p189
        %p330 = pneg %p218
        %p331 = pneg %p215
        %s332 = sand.u32 %s205, 1
        %s333 = sand.u32 %s205, 1
        %s334 = smul.addr %s333, 256
        %s335 = scalar_lea.vmem [#allocation2], %s334
        %s336 = smul.u32 32, %s19
        %s337 = ssub.s32 125, %s336
        %p338 = scmp.lt.s32.totalorder %s337, 32
        %s339 = scalar_select %p338, %s337, 32
        %s340 = smul.u32 128, %s339
        %p341 = scmp.lt.s32.totalorder %s336, 124
        %s342 = scalar_select %p341, %s336, 124
        %s343 = smul.addr %s342, 8
        %s344 = scalar_lea.vmem %s0, %s343
        %s345 = smul.u32 32, %s19
        %s346 = ssub.s32 125, %s345
        %p347 = scmp.lt.s32.totalorder %s346, 32
        %s348 = scalar_select %p347, %s346, 32
        %s349 = smul.u32 128, %s348
        %s350 = smul.u32 32, %s19
        %s351 = ssub.s32 125, %s350
        %p352 = scmp.lt.s32.totalorder %s351, 32
        %s353 = scalar_select %p352, %s351, 32
        %s354 = smul.u32 128, %s353
        %p355 = scmp.lt.s32.totalorder %s350, 124
        %s356 = scalar_select %p355, %s350, 124
        %s357 = smul.addr %s356, 8
        %s358 = scalar_lea.vmem %s1, %s357
        %s359 = smul.u32 32, %s19
        %s360 = ssub.s32 125, %s359
        %p361 = scmp.lt.s32.totalorder %s360, 32
        %s362 = scalar_select %p361, %s360, 32
        %s363 = smul.u32 128, %s362
        %s364 = smul.u32 32, %s19
        %s365 = ssub.s32 125, %s364
        %p366 = scmp.lt.s32.totalorder %s365, 32
        %s367 = scalar_select %p366, %s365, 32
        %s368 = smul.u32 128, %s367
        %v370 = vld [vmem:[%s344] sm:$0xff]
        %v371 = vld [vmem:[%s344 + $0x8] sm:$0xff]
        %v372 = vld [vmem:[%s344 + $0x10] sm:$0xff]
        %v373 = vld [vmem:[%s344 + $0x18] sm:$0xff]
        %v374 = vld [vmem:[%s344 + $0x20] sm:$0xff]
        %v375 = vld [vmem:[%s344 + $0x28] sm:$0xff]
        %v376 = vld [vmem:[%s344 + $0x30] sm:$0xff]
        %v377 = vld [vmem:[%s344 + $0x38] sm:$0xff]
        %v378 = vld [vmem:[%s344 + $0x40] sm:$0xff]
        %v379 = vld [vmem:[%s344 + $0x48] sm:$0xff]
        %v380 = vld [vmem:[%s344 + $0x50] sm:$0xff]
        %v381 = vld [vmem:[%s344 + $0x58] sm:$0xff]
        %v382 = vld [vmem:[%s344 + $0x60] sm:$0xff]
        %v383 = vld [vmem:[%s344 + $0x68] sm:$0xff]
        %v384 = vld [vmem:[%s344 + $0x70] sm:$0xff]
        %v385 = vld [vmem:[%s344 + $0x78] sm:$0xff]
        %v386 = vld [vmem:[%s344 + $0x80] sm:$0xff]
        %v387 = vld [vmem:[%s344 + $0x88] sm:$0xff]
        %v388 = vld [vmem:[%s344 + $0x90] sm:$0xff]
        %v389 = vld [vmem:[%s344 + $0x98] sm:$0xff]
        %v390 = vld [vmem:[%s344 + $0xa0] sm:$0xff]
        %v391 = vld [vmem:[%s344 + $0xa8] sm:$0xff]
        %v392 = vld [vmem:[%s344 + $0xb0] sm:$0xff]
        %v393 = vld [vmem:[%s344 + $0xb8] sm:$0xff]
        %v394 = vld [vmem:[%s344 + $0xc0] sm:$0xff]
        %v395 = vld [vmem:[%s344 + $0xc8] sm:$0xff]
        %v396 = vld [vmem:[%s344 + $0xd0] sm:$0xff]
        %v397 = vld [vmem:[%s344 + $0xd8] sm:$0xff]
        %v398 = vld [vmem:[%s344 + $0xe0] sm:$0xff]
        %v399 = vld [vmem:[%s344 + $0xe8] sm:$0xff]
        %v400 = vld [vmem:[%s344 + $0xf0] sm:$0xff]
        %v401 = vld [vmem:[%s344 + $0xf8] sm:$0xff]
        %v402 = vld [vmem:[%s358] sm:$0xff]
        %v403 = vld [vmem:[%s358 + $0x8] sm:$0xff]
        %v404 = vld [vmem:[%s358 + $0x10] sm:$0xff]
        %v405 = vld [vmem:[%s358 + $0x18] sm:$0xff]
        %v406 = vld [vmem:[%s358 + $0x20] sm:$0xff]
        %v407 = vld [vmem:[%s358 + $0x28] sm:$0xff]
        %v408 = vld [vmem:[%s358 + $0x30] sm:$0xff]
        %v409 = vld [vmem:[%s358 + $0x38] sm:$0xff]
        %v410 = vld [vmem:[%s358 + $0x40] sm:$0xff]
        %v411 = vld [vmem:[%s358 + $0x48] sm:$0xff]
        %v412 = vld [vmem:[%s358 + $0x50] sm:$0xff]
        %v413 = vld [vmem:[%s358 + $0x58] sm:$0xff]
        %v414 = vld [vmem:[%s358 + $0x60] sm:$0xff]
        %v415 = vld [vmem:[%s358 + $0x68] sm:$0xff]
        %v416 = vld [vmem:[%s358 + $0x70] sm:$0xff]
        %v417 = vld [vmem:[%s358 + $0x78] sm:$0xff]
        %v418 = vld [vmem:[%s358 + $0x80] sm:$0xff]
        %v419 = vld [vmem:[%s358 + $0x88] sm:$0xff]
        %v420 = vld [vmem:[%s358 + $0x90] sm:$0xff]
        %v421 = vld [vmem:[%s358 + $0x98] sm:$0xff]
        %v422 = vld [vmem:[%s358 + $0xa0] sm:$0xff]
        %v423 = vld [vmem:[%s358 + $0xa8] sm:$0xff]
        %v424 = vld [vmem:[%s358 + $0xb0] sm:$0xff]
        %v425 = vld [vmem:[%s358 + $0xb8] sm:$0xff]
        %v426 = vld [vmem:[%s358 + $0xc0] sm:$0xff]
        %v427 = vld [vmem:[%s358 + $0xc8] sm:$0xff]
        %v428 = vld [vmem:[%s358 + $0xd0] sm:$0xff]
        %v429 = vld [vmem:[%s358 + $0xd8] sm:$0xff]
        %v430 = vld [vmem:[%s358 + $0xe0] sm:$0xff]
        %v431 = vld [vmem:[%s358 + $0xe8] sm:$0xff]
        %v432 = vld [vmem:[%s358 + $0xf0] sm:$0xff]
        %v433 = vld [vmem:[%s358 + $0xf8] sm:$0xff]
        %466 = vrot.lane.b32.xlu0 %v402, 3
        %v467 = vpop.permute.xlu0 %466
        %468 = vrot.lane.b32.xlu0 %v403, 3
        %v469 = vpop.permute.xlu0 %468
        %470 = vrot.lane.b32.xlu0 %v404, 3
        %v471 = vpop.permute.xlu0 %470
        %472 = vrot.lane.b32.xlu0 %v405, 3
        %v473 = vpop.permute.xlu0 %472
        %474 = vrot.lane.b32.xlu0 %v406, 3
        %v475 = vpop.permute.xlu0 %474
        %476 = vrot.lane.b32.xlu0 %v407, 3
        %v477 = vpop.permute.xlu0 %476
        %478 = vrot.lane.b32.xlu0 %v408, 3
        %v479 = vpop.permute.xlu0 %478
        %480 = vrot.lane.b32.xlu0 %v409, 3
        %v481 = vpop.permute.xlu0 %480
        %482 = vrot.lane.b32.xlu0 %v410, 3
        %v483 = vpop.permute.xlu0 %482
        %484 = vrot.lane.b32.xlu0 %v411, 3
        %v485 = vpop.permute.xlu0 %484
        %486 = vrot.lane.b32.xlu0 %v412, 3
        %v487 = vpop.permute.xlu0 %486
        %488 = vrot.lane.b32.xlu0 %v413, 3
        %v489 = vpop.permute.xlu0 %488
        %490 = vrot.lane.b32.xlu0 %v414, 3
        %v491 = vpop.permute.xlu0 %490
        %492 = vrot.lane.b32.xlu0 %v415, 3
        %v493 = vpop.permute.xlu0 %492
        %494 = vrot.lane.b32.xlu0 %v416, 3
        %v495 = vpop.permute.xlu0 %494
        %496 = vrot.lane.b32.xlu0 %v417, 3
        %v497 = vpop.permute.xlu0 %496
        %498 = vrot.lane.b32.xlu0 %v418, 3
        %v499 = vpop.permute.xlu0 %498
        %500 = vrot.lane.b32.xlu0 %v419, 3
        %v501 = vpop.permute.xlu0 %500
        %502 = vrot.lane.b32.xlu0 %v420, 3
        %v503 = vpop.permute.xlu0 %502
        %504 = vrot.lane.b32.xlu0 %v421, 3
        %v505 = vpop.permute.xlu0 %504
        %506 = vrot.lane.b32.xlu0 %v422, 3
        %v507 = vpop.permute.xlu0 %506
        %508 = vrot.lane.b32.xlu0 %v423, 3
        %v509 = vpop.permute.xlu0 %508
        %510 = vrot.lane.b32.xlu0 %v424, 3
        %v511 = vpop.permute.xlu0 %510
        %512 = vrot.lane.b32.xlu0 %v425, 3
        %v513 = vpop.permute.xlu0 %512
        %514 = vrot.lane.b32.xlu0 %v426, 3
        %v515 = vpop.permute.xlu0 %514
        %516 = vrot.lane.b32.xlu0 %v427, 3
        %v517 = vpop.permute.xlu0 %516
        %518 = vrot.lane.b32.xlu0 %v428, 3
        %v519 = vpop.permute.xlu0 %518
        %520 = vrot.lane.b32.xlu0 %v429, 3
        %v521 = vpop.permute.xlu0 %520
        %522 = vrot.lane.b32.xlu0 %v430, 3
        %v523 = vpop.permute.xlu0 %522
        %524 = vrot.lane.b32.xlu0 %v431, 3
        %v525 = vpop.permute.xlu0 %524
        %526 = vrot.lane.b32.xlu0 %v432, 3
        %v527 = vpop.permute.xlu0 %526
        %528 = vrot.lane.b32.xlu0 %v433, 3
        %v529 = vpop.permute.xlu0 %528
        %vm562 = vcmask 23552
        %v563 = vsel %vm562, %v370, %v467
        %v564 = vsel %vm562, %v371, %v469
        %v565 = vsel %vm562, %v372, %v471
        %v566 = vsel %vm562, %v373, %v473
        %v567 = vsel %vm562, %v374, %v475
        %v568 = vsel %vm562, %v375, %v477
        %v569 = vsel %vm562, %v376, %v479
        %v570 = vsel %vm562, %v377, %v481
        %v571 = vsel %vm562, %v378, %v483
        %v572 = vsel %vm562, %v379, %v485
        %v573 = vsel %vm562, %v380, %v487
        %v574 = vsel %vm562, %v381, %v489
        %v575 = vsel %vm562, %v382, %v491
        %v576 = vsel %vm562, %v383, %v493
        %v577 = vsel %vm562, %v384, %v495
        %v578 = vsel %vm562, %v385, %v497
        %v579 = vsel %vm562, %v386, %v499
        %v580 = vsel %vm562, %v387, %v501
        %v581 = vsel %vm562, %v388, %v503
        %v582 = vsel %vm562, %v389, %v505
        %v583 = vsel %vm562, %v390, %v507
        %v584 = vsel %vm562, %v391, %v509
        %v585 = vsel %vm562, %v392, %v511
        %v586 = vsel %vm562, %v393, %v513
        %v587 = vsel %vm562, %v394, %v515
        %v588 = vsel %vm562, %v395, %v517
        %v589 = vsel %vm562, %v396, %v519
        %v590 = vsel %vm562, %v397, %v521
        %v591 = vsel %vm562, %v398, %v523
        %v592 = vsel %vm562, %v399, %v525
        %v593 = vsel %vm562, %v400, %v527
        %v594 = vsel %vm562, %v401, %v529
        %v595 = vpack.c.bf16 %v564, %v563
        %v596 = vpack.c.bf16 %v566, %v565
        %v597 = vpack.c.bf16 %v568, %v567
        %v598 = vpack.c.bf16 %v570, %v569
        %v599 = vpack.c.bf16 %v572, %v571
        %v600 = vpack.c.bf16 %v574, %v573
        %v601 = vpack.c.bf16 %v576, %v575
        %v602 = vpack.c.bf16 %v578, %v577
        %v603 = vpack.c.bf16 %v580, %v579
        %v604 = vpack.c.bf16 %v582, %v581
        %v605 = vpack.c.bf16 %v584, %v583
        %v606 = vpack.c.bf16 %v586, %v585
        %v607 = vpack.c.bf16 %v588, %v587
        %v608 = vpack.c.bf16 %v590, %v589
        %v609 = vpack.c.bf16 %v592, %v591
        %v610 = vpack.c.bf16 %v594, %v593
        %v611 = vld [vmem:[%s2] sm:$0xf]
        %v612 = vld [vmem:[%s2 + $0x4] sm:$0xf]
        %v613 = vld [vmem:[%s2 + $0x8] sm:$0xf]
        %v614 = vld [vmem:[%s2 + $0xc] sm:$0xf]
        %v615 = vld [vmem:[%s3] sm:$0x1]
        %v617 = vlaneseq
        %v618 = vshrl.u32 %v617, 7
        %v619 = vsub.s32 0, %v618
        %v620 = vrot.slane %v615, %v619
        %v626 = vunpack.c.l.b16 %v611
        %v627 = vunpack.c.l.b16 %v612
        %v628 = vunpack.c.l.b16 %v613
        %v629 = vunpack.c.l.b16 %v614
        %v630 = vpack.c.b16 %v627, %v626
        %v631 = vpack.c.b16 %v629, %v628
        %vm634 = vcmask 261120
        %v636 = vsel %vm634, %v595, 0
        %v639 = vsel %vm634, %v596, 0
        %v642 = vsel %vm634, %v597, 0
        %v645 = vsel %vm634, %v598, 0
        %v648 = vsel %vm634, %v599, 0
        %v651 = vsel %vm634, %v600, 0
        %v654 = vsel %vm634, %v601, 0
        %v657 = vsel %vm634, %v602, 0
        %v660 = vsel %vm634, %v603, 0
        %v663 = vsel %vm634, %v604, 0
        %v666 = vsel %vm634, %v605, 0
        %v669 = vsel %vm634, %v606, 0
        %v672 = vsel %vm634, %v607, 0
        %v675 = vsel %vm634, %v608, 0
        %v678 = vsel %vm634, %v609, 0
        %v681 = vsel %vm634, %v610, 0
        %683 = vmatprep.subr.bf16.mxu0 0
        %684 = vmatpush1.bf16.msra.mxu0 %v630
        %685 = vmatprep.subr.bf16.mxu0 0
        %686 = vmatpush1.bf16.msra.mxu0 %v631
        %687 = vmatprep.subr.bf16.mxu0 0
        %688 = vmatpush1.bf16.msra.mxu0 0
        %689 = vmatprep.subr.bf16.mxu0 0
        %690 = vmatpush1.bf16.msra.mxu0 0
        %691 = vmatprep.subr.bf16.mxu0 0
        %692 = vmatpush1.bf16.msra.mxu0 0
        %693 = vmatprep.subr.bf16.mxu0 0
        %694 = vmatpush1.bf16.msra.mxu0 0
        %695 = vmatprep.subr.bf16.mxu0 0
        %696 = vmatpush1.bf16.msra.mxu0 0
        %697 = vmatprep.subr.bf16.mxu0 0
        %698 = vmatpush1.bf16.msra.mxu0 0
        %699 = vmatprep.subr.bf16.mxu0 0
        %700 = vmatpush1.bf16.msra.mxu0 0
        %701 = vmatprep.subr.bf16.mxu0 0
        %702 = vmatpush1.bf16.msra.mxu0 0
        %703 = vmatprep.subr.bf16.mxu0 0
        %704 = vmatpush1.bf16.msra.mxu0 0
        %705 = vmatprep.subr.bf16.mxu0 0
        %706 = vmatpush1.bf16.msra.mxu0 0
        %707 = vmatprep.subr.bf16.mxu0 0
        %708 = vmatpush1.bf16.msra.mxu0 0
        %709 = vmatprep.subr.bf16.mxu0 0
        %710 = vmatpush1.bf16.msra.mxu0 0
        %711 = vmatprep.subr.bf16.mxu0 0
        %712 = vmatpush1.bf16.msra.mxu0 0
        %713 = vmatprep.subr.bf16.mxu0 0
        %714 = vmatpush1.bf16.msra.mxu0 0
        %715 = vmatprep.mubr.bf16.mxu0 0
        %716 = vmatmul.mubr.bf16.gmra.mrb[0].mxu0 %v636
        %v717 = vpop.f32.mrb[0].mxu0
        %v718 = vadd.f32 %v620, %v717
        %v719 = vpop.f32.mrb[0].mxu0
        %v720 = vpop.f32.mrb[0].mxu0
        %v721 = vadd.f32 %v620, %v720
        %v722 = vpop.f32.mrb[0].mxu0
        %723 = vmatprep.mubr.bf16.mxu0 0
        %724 = vmatmul.mubr.bf16.gmra.mrb[0].mxu0 %v639
        %v725 = vpop.f32.mrb[0].mxu0
        %v726 = vadd.f32 %v620, %v725
        %v727 = vpop.f32.mrb[0].mxu0
        %v728 = vpop.f32.mrb[0].mxu0
        %v729 = vadd.f32 %v620, %v728
        %v730 = vpop.f32.mrb[0].mxu0
        %731 = vmatprep.mubr.bf16.mxu0 0
        %732 = vmatmul.mubr.bf16.gmra.mrb[0].mxu0 %v642
        %v733 = vpop.f32.mrb[0].mxu0
        %v734 = vadd.f32 %v620, %v733
        %v735 = vpop.f32.mrb[0].mxu0
        %v736 = vpop.f32.mrb[0].mxu0
        %v737 = vadd.f32 %v620, %v736
        %v738 = vpop.f32.mrb[0].mxu0
        %739 = vmatprep.mubr.bf16.mxu0 0
        %740 = vmatmul.mubr.bf16.gmra.mrb[0].mxu0 %v645
        %v741 = vpop.f32.mrb[0].mxu0
        %v742 = vadd.f32 %v620, %v741
        %v743 = vpop.f32.mrb[0].mxu0
        %v744 = vpop.f32.mrb[0].mxu0
        %v745 = vadd.f32 %v620, %v744
        %v746 = vpop.f32.mrb[0].mxu0
        %747 = vmatprep.mubr.bf16.mxu0 0
        %748 = vmatmul.mubr.bf16.gmra.mrb[0].mxu0 %v648
        %v749 = vpop.f32.mrb[0].mxu0
        %v750 = vadd.f32 %v620, %v749
        %v751 = vpop.f32.mrb[0].mxu0
        %v752 = vpop.f32.mrb[0].mxu0
        %v753 = vadd.f32 %v620, %v752
        %v754 = vpop.f32.mrb[0].mxu0
        %755 = vmatprep.mubr.bf16.mxu0 0
        %756 = vmatmul.mubr.bf16.gmra.mrb[0].mxu0 %v651
        %v757 = vpop.f32.mrb[0].mxu0
        %v758 = vadd.f32 %v620, %v757
        %v759 = vpop.f32.mrb[0].mxu0
        %v760 = vpop.f32.mrb[0].mxu0
        %v761 = vadd.f32 %v620, %v760
        %v762 = vpop.f32.mrb[0].mxu0
        %763 = vmatprep.mubr.bf16.mxu0 0
        %764 = vmatmul.mubr.bf16.gmra.mrb[0].mxu0 %v654
        %v765 = vpop.f32.mrb[0].mxu0
        %v766 = vadd.f32 %v620, %v765
        %v767 = vpop.f32.mrb[0].mxu0
        %v768 = vpop.f32.mrb[0].mxu0
        %v769 = vadd.f32 %v620, %v768
        %v770 = vpop.f32.mrb[0].mxu0
        %771 = vmatprep.mubr.bf16.mxu0 0
        %772 = vmatmul.mubr.bf16.gmra.mrb[0].mxu0 %v657
        %v773 = vpop.f32.mrb[0].mxu0
        %v774 = vadd.f32 %v620, %v773
        %v775 = vpop.f32.mrb[0].mxu0
        %v776 = vpop.f32.mrb[0].mxu0
        %v777 = vadd.f32 %v620, %v776
        %v778 = vpop.f32.mrb[0].mxu0
        %779 = vmatprep.mubr.bf16.mxu0 0
        %780 = vmatmul.mubr.bf16.gmra.mrb[0].mxu0 %v660
        %v781 = vpop.f32.mrb[0].mxu0
        %v782 = vadd.f32 %v620, %v781
        %v783 = vpop.f32.mrb[0].mxu0
        %v784 = vpop.f32.mrb[0].mxu0
        %v785 = vadd.f32 %v620, %v784
        %v786 = vpop.f32.mrb[0].mxu0
        %787 = vmatprep.mubr.bf16.mxu0 0
        %788 = vmatmul.mubr.bf16.gmra.mrb[0].mxu0 %v663
        %v789 = vpop.f32.mrb[0].mxu0
        %v790 = vadd.f32 %v620, %v789
        %v791 = vpop.f32.mrb[0].mxu0
        %v792 = vpop.f32.mrb[0].mxu0
        %v793 = vadd.f32 %v620, %v792
        %v794 = vpop.f32.mrb[0].mxu0
        %795 = vmatprep.mubr.bf16.mxu0 0
        %796 = vmatmul.mubr.bf16.gmra.mrb[0].mxu0 %v666
        %v797 = vpop.f32.mrb[0].mxu0
        %v798 = vadd.f32 %v620, %v797
        %v799 = vpop.f32.mrb[0].mxu0
        %v800 = vpop.f32.mrb[0].mxu0
        %v801 = vadd.f32 %v620, %v800
        %v802 = vpop.f32.mrb[0].mxu0
        %803 = vmatprep.mubr.bf16.mxu0 0
        %804 = vmatmul.mubr.bf16.gmra.mrb[0].mxu0 %v669
        %v805 = vpop.f32.mrb[0].mxu0
        %v806 = vadd.f32 %v620, %v805
        %v807 = vpop.f32.mrb[0].mxu0
        %v808 = vpop.f32.mrb[0].mxu0
        %v809 = vadd.f32 %v620, %v808
        %v810 = vpop.f32.mrb[0].mxu0
        %811 = vmatprep.mubr.bf16.mxu0 0
        %812 = vmatmul.mubr.bf16.gmra.mrb[0].mxu0 %v672
        %v813 = vpop.f32.mrb[0].mxu0
        %v814 = vadd.f32 %v620, %v813
        %v815 = vpop.f32.mrb[0].mxu0
        %v816 = vpop.f32.mrb[0].mxu0
        %v817 = vadd.f32 %v620, %v816
        %v818 = vpop.f32.mrb[0].mxu0
        %819 = vmatprep.mubr.bf16.mxu0 0
        %820 = vmatmul.mubr.bf16.gmra.mrb[0].mxu0 %v675
        %v821 = vpop.f32.mrb[0].mxu0
        %v822 = vadd.f32 %v620, %v821
        %v823 = vpop.f32.mrb[0].mxu0
        %v824 = vpop.f32.mrb[0].mxu0
        %v825 = vadd.f32 %v620, %v824
        %v826 = vpop.f32.mrb[0].mxu0
        %827 = vmatprep.mubr.bf16.mxu0 0
        %828 = vmatmul.mubr.bf16.gmra.mrb[0].mxu0 %v678
        %v829 = vpop.f32.mrb[0].mxu0
        %v830 = vadd.f32 %v620, %v829
        %v831 = vpop.f32.mrb[0].mxu0
        %v832 = vpop.f32.mrb[0].mxu0
        %v833 = vadd.f32 %v620, %v832
        %v834 = vpop.f32.mrb[0].mxu0
        %835 = vmatprep.mubr.bf16.mxu0 0
        %836 = vmatmul.mubr.bf16.gmra.mrb[0].mxu0 %v681
        %v837 = vpop.f32.mrb[0].mxu0
        %v838 = vadd.f32 %v620, %v837
        %v839 = vpop.f32.mrb[0].mxu0
        %v840 = vpop.f32.mrb[0].mxu0
        %v841 = vadd.f32 %v620, %v840
        %v842 = vpop.f32.mrb[0].mxu0
        %843 = vdwg.mxu0
        %v844 = vmax.f32 %v718, 0.0
        %v845 = vmax.f32 %v721, 0.0
        %v846 = vmax.f32 %v726, 0.0
        %v847 = vmax.f32 %v729, 0.0
        %v848 = vmax.f32 %v734, 0.0
        %v849 = vmax.f32 %v737, 0.0
        %v850 = vmax.f32 %v742, 0.0
        %v851 = vmax.f32 %v745, 0.0
        %v852 = vmax.f32 %v750, 0.0
        %v853 = vmax.f32 %v753, 0.0
        %v854 = vmax.f32 %v758, 0.0
        %v855 = vmax.f32 %v761, 0.0
        %v856 = vmax.f32 %v766, 0.0
        %v857 = vmax.f32 %v769, 0.0
        %v858 = vmax.f32 %v774, 0.0
        %v859 = vmax.f32 %v777, 0.0
        %v860 = vmax.f32 %v782, 0.0
        %v861 = vmax.f32 %v785, 0.0
        %v862 = vmax.f32 %v790, 0.0
        %v863 = vmax.f32 %v793, 0.0
        %v864 = vmax.f32 %v798, 0.0
        %v865 = vmax.f32 %v801, 0.0
        %v866 = vmax.f32 %v806, 0.0
        %v867 = vmax.f32 %v809, 0.0
        %v868 = vmax.f32 %v814, 0.0
        %v869 = vmax.f32 %v817, 0.0
        %v870 = vmax.f32 %v822, 0.0
        %v871 = vmax.f32 %v825, 0.0
        %v872 = vmax.f32 %v830, 0.0
        %v873 = vmax.f32 %v833, 0.0
        %v874 = vmax.f32 %v838, 0.0
        %v875 = vmax.f32 %v841, 0.0
        %v876 = vpack.c.bf16 %v845, %v844
        %v877 = vpack.c.bf16 %v847, %v846
        %v878 = vpack.c.bf16 %v849, %v848
        %v879 = vpack.c.bf16 %v851, %v850
        %v880 = vpack.c.bf16 %v853, %v852
        %v881 = vpack.c.bf16 %v855, %v854
        %v882 = vpack.c.bf16 %v857, %v856
        %v883 = vpack.c.bf16 %v859, %v858
        %v884 = vpack.c.bf16 %v861, %v860
        %v885 = vpack.c.bf16 %v863, %v862
        %v886 = vpack.c.bf16 %v865, %v864
        %v887 = vpack.c.bf16 %v867, %v866
        %v888 = vpack.c.bf16 %v869, %v868
        %v889 = vpack.c.bf16 %v871, %v870
        %v890 = vpack.c.bf16 %v873, %v872
        %v891 = vpack.c.bf16 %v875, %v874
        %v892 = vld [vmem:[%s4] sm:$0xf]
        %v893 = vld [vmem:[%s4 + $0x4] sm:$0xf]
        %v894 = vld [vmem:[%s4 + $0x8] sm:$0xf]
        %v895 = vld [vmem:[%s4 + $0xc] sm:$0xf]
        %v896 = vld [vmem:[%s4 + $0x10] sm:$0xf]
        %v897 = vld [vmem:[%s4 + $0x14] sm:$0xf]
        %v898 = vld [vmem:[%s4 + $0x18] sm:$0xf]
        %v899 = vld [vmem:[%s4 + $0x1c] sm:$0xf]
        %v900 = vld [vmem:[%s5] sm:$0x1]
        %v902 = vlaneseq
        %v903 = vshrl.u32 %v902, 7
        %v904 = vsub.s32 0, %v903
        %v905 = vrot.slane %v900, %v904
        %v915 = vunpack.c.l.b16 %v892
        %v916 = vunpack.c.l.b16 %v893
        %v917 = vunpack.c.l.b16 %v894
        %v918 = vunpack.c.l.b16 %v895
        %v919 = vunpack.c.l.b16 %v896
        %v920 = vunpack.c.l.b16 %v897
        %v921 = vunpack.c.l.b16 %v898
        %v922 = vunpack.c.l.b16 %v899
        %v923 = vpack.c.b16 %v916, %v915
        %v924 = vpack.c.b16 %v918, %v917
        %v925 = vpack.c.b16 %v920, %v919
        %v926 = vpack.c.b16 %v922, %v921
        %vm931 = vcmask 523264
        %v933 = vsel %vm931, %v876, 0
        %v936 = vsel %vm931, %v877, 0
        %v939 = vsel %vm931, %v878, 0
        %v942 = vsel %vm931, %v879, 0
        %v945 = vsel %vm931, %v880, 0
        %v948 = vsel %vm931, %v881, 0
        %v951 = vsel %vm931, %v882, 0
        %v954 = vsel %vm931, %v883, 0
        %v957 = vsel %vm931, %v884, 0
        %v960 = vsel %vm931, %v885, 0
        %v963 = vsel %vm931, %v886, 0
        %v966 = vsel %vm931, %v887, 0
        %v969 = vsel %vm931, %v888, 0
        %v972 = vsel %vm931, %v889, 0
        %v975 = vsel %vm931, %v890, 0
        %v978 = vsel %vm931, %v891, 0
        %980 = vmatprep.subr.bf16.mxu0 0
        %981 = vmatpush1.bf16.msra.mxu0 %v923
        %982 = vmatprep.subr.bf16.mxu0 0
        %983 = vmatpush1.bf16.msra.mxu0 %v924
        %984 = vmatprep.subr.bf16.mxu0 0
        %985 = vmatpush1.bf16.msra.mxu0 %v925
        %986 = vmatprep.subr.bf16.mxu0 0
        %987 = vmatpush1.bf16.msra.mxu0 %v926
        %988 = vmatprep.subr.bf16.mxu0 0
        %989 = vmatpush1.bf16.msra.mxu0 0
        %990 = vmatprep.subr.bf16.mxu0 0
        %991 = vmatpush1.bf16.msra.mxu0 0
        %992 = vmatprep.subr.bf16.mxu0 0
        %993 = vmatpush1.bf16.msra.mxu0 0
        %994 = vmatprep.subr.bf16.mxu0 0
        %995 = vmatpush1.bf16.msra.mxu0 0
        %996 = vmatprep.subr.bf16.mxu0 0
        %997 = vmatpush1.bf16.msra.mxu0 0
        %998 = vmatprep.subr.bf16.mxu0 0
        %999 = vmatpush1.bf16.msra.mxu0 0
        %1000 = vmatprep.subr.bf16.mxu0 0
        %1001 = vmatpush1.bf16.msra.mxu0 0
        %1002 = vmatprep.subr.bf16.mxu0 0
        %1003 = vmatpush1.bf16.msra.mxu0 0
        %1004 = vmatprep.subr.bf16.mxu0 0
        %1005 = vmatpush1.bf16.msra.mxu0 0
        %1006 = vmatprep.subr.bf16.mxu0 0
        %1007 = vmatpush1.bf16.msra.mxu0 0
        %1008 = vmatprep.subr.bf16.mxu0 0
        %1009 = vmatpush1.bf16.msra.mxu0 0
        %1010 = vmatprep.subr.bf16.mxu0 0
        %1011 = vmatpush1.bf16.msra.mxu0 0
        %1012 = vmatprep.mubr.bf16.mxu0 0
        %1013 = vmatmul.mubr.bf16.gmra.mrb[0].mxu0 %v933
        %v1014 = vpop.f32.mrb[0].mxu0
        %v1015 = vadd.f32 %v905, %v1014
        %v1016 = vpop.f32.mrb[0].mxu0
        %v1017 = vpop.f32.mrb[0].mxu0
        %v1018 = vadd.f32 %v905, %v1017
        %v1019 = vpop.f32.mrb[0].mxu0
        %1020 = vmatprep.mubr.bf16.mxu0 0
        %1021 = vmatmul.mubr.bf16.gmra.mrb[0].mxu0 %v936
        %v1022 = vpop.f32.mrb[0].mxu0
        %v1023 = vadd.f32 %v905, %v1022
        %v1024 = vpop.f32.mrb[0].mxu0
        %v1025 = vpop.f32.mrb[0].mxu0
        %v1026 = vadd.f32 %v905, %v1025
        %v1027 = vpop.f32.mrb[0].mxu0
        %1028 = vmatprep.mubr.bf16.mxu0 0
        %1029 = vmatmul.mubr.bf16.gmra.mrb[0].mxu0 %v939
        %v1030 = vpop.f32.mrb[0].mxu0
        %v1031 = vadd.f32 %v905, %v1030
        %v1032 = vpop.f32.mrb[0].mxu0
        %v1033 = vpop.f32.mrb[0].mxu0
        %v1034 = vadd.f32 %v905, %v1033
        %v1035 = vpop.f32.mrb[0].mxu0
        %1036 = vmatprep.mubr.bf16.mxu0 0
        %1037 = vmatmul.mubr.bf16.gmra.mrb[0].mxu0 %v942
        %v1038 = vpop.f32.mrb[0].mxu0
        %v1039 = vadd.f32 %v905, %v1038
        %v1040 = vpop.f32.mrb[0].mxu0
        %v1041 = vpop.f32.mrb[0].mxu0
        %v1042 = vadd.f32 %v905, %v1041
        %v1043 = vpop.f32.mrb[0].mxu0
        %1044 = vmatprep.mubr.bf16.mxu0 0
        %1045 = vmatmul.mubr.bf16.gmra.mrb[0].mxu0 %v945
        %v1046 = vpop.f32.mrb[0].mxu0
        %v1047 = vadd.f32 %v905, %v1046
        %v1048 = vpop.f32.mrb[0].mxu0
        %v1049 = vpop.f32.mrb[0].mxu0
        %v1050 = vadd.f32 %v905, %v1049
        %v1051 = vpop.f32.mrb[0].mxu0
        %1052 = vmatprep.mubr.bf16.mxu0 0
        %1053 = vmatmul.mubr.bf16.gmra.mrb[0].mxu0 %v948
        %v1054 = vpop.f32.mrb[0].mxu0
        %v1055 = vadd.f32 %v905, %v1054
        %v1056 = vpop.f32.mrb[0].mxu0
        %v1057 = vpop.f32.mrb[0].mxu0
        %v1058 = vadd.f32 %v905, %v1057
        %v1059 = vpop.f32.mrb[0].mxu0
        %1060 = vmatprep.mubr.bf16.mxu0 0
        %1061 = vmatmul.mubr.bf16.gmra.mrb[0].mxu0 %v951
        %v1062 = vpop.f32.mrb[0].mxu0
        %v1063 = vadd.f32 %v905, %v1062
        %v1064 = vpop.f32.mrb[0].mxu0
        %v1065 = vpop.f32.mrb[0].mxu0
        %v1066 = vadd.f32 %v905, %v1065
        %v1067 = vpop.f32.mrb[0].mxu0
        %1068 = vmatprep.mubr.bf16.mxu0 0
        %1069 = vmatmul.mubr.bf16.gmra.mrb[0].mxu0 %v954
        %v1070 = vpop.f32.mrb[0].mxu0
        %v1071 = vadd.f32 %v905, %v1070
        %v1072 = vpop.f32.mrb[0].mxu0
        %v1073 = vpop.f32.mrb[0].mxu0
        %v1074 = vadd.f32 %v905, %v1073
        %v1075 = vpop.f32.mrb[0].mxu0
        %1076 = vmatprep.mubr.bf16.mxu0 0
        %1077 = vmatmul.mubr.bf16.gmra.mrb[0].mxu0 %v957
        %v1078 = vpop.f32.mrb[0].mxu0
        %v1079 = vadd.f32 %v905, %v1078
        %v1080 = vpop.f32.mrb[0].mxu0
        %v1081 = vpop.f32.mrb[0].mxu0
        %v1082 = vadd.f32 %v905, %v1081
        %v1083 = vpop.f32.mrb[0].mxu0
        %1084 = vmatprep.mubr.bf16.mxu0 0
        %1085 = vmatmul.mubr.bf16.gmra.mrb[0].mxu0 %v960
        %v1086 = vpop.f32.mrb[0].mxu0
        %v1087 = vadd.f32 %v905, %v1086
        %v1088 = vpop.f32.mrb[0].mxu0
        %v1089 = vpop.f32.mrb[0].mxu0
        %v1090 = vadd.f32 %v905, %v1089
        %v1091 = vpop.f32.mrb[0].mxu0
        %1092 = vmatprep.mubr.bf16.mxu0 0
        %1093 = vmatmul.mubr.bf16.gmra.mrb[0].mxu0 %v963
        %v1094 = vpop.f32.mrb[0].mxu0
        %v1095 = vadd.f32 %v905, %v1094
        %v1096 = vpop.f32.mrb[0].mxu0
        %v1097 = vpop.f32.mrb[0].mxu0
        %v1098 = vadd.f32 %v905, %v1097
        %v1099 = vpop.f32.mrb[0].mxu0
        %1100 = vmatprep.mubr.bf16.mxu0 0
        %1101 = vmatmul.mubr.bf16.gmra.mrb[0].mxu0 %v966
        %v1102 = vpop.f32.mrb[0].mxu0
        %v1103 = vadd.f32 %v905, %v1102
        %v1104 = vpop.f32.mrb[0].mxu0
        %v1105 = vpop.f32.mrb[0].mxu0
        %v1106 = vadd.f32 %v905, %v1105
        %v1107 = vpop.f32.mrb[0].mxu0
        %1108 = vmatprep.mubr.bf16.mxu0 0
        %1109 = vmatmul.mubr.bf16.gmra.mrb[0].mxu0 %v969
        %v1110 = vpop.f32.mrb[0].mxu0
        %v1111 = vadd.f32 %v905, %v1110
        %v1112 = vpop.f32.mrb[0].mxu0
        %v1113 = vpop.f32.mrb[0].mxu0
        %v1114 = vadd.f32 %v905, %v1113
        %v1115 = vpop.f32.mrb[0].mxu0
        %1116 = vmatprep.mubr.bf16.mxu0 0
        %1117 = vmatmul.mubr.bf16.gmra.mrb[0].mxu0 %v972
        %v1118 = vpop.f32.mrb[0].mxu0
        %v1119 = vadd.f32 %v905, %v1118
        %v1120 = vpop.f32.mrb[0].mxu0
        %v1121 = vpop.f32.mrb[0].mxu0
        %v1122 = vadd.f32 %v905, %v1121
        %v1123 = vpop.f32.mrb[0].mxu0
        %1124 = vmatprep.mubr.bf16.mxu0 0
        %1125 = vmatmul.mubr.bf16.gmra.mrb[0].mxu0 %v975
        %v1126 = vpop.f32.mrb[0].mxu0
        %v1127 = vadd.f32 %v905, %v1126
        %v1128 = vpop.f32.mrb[0].mxu0
        %v1129 = vpop.f32.mrb[0].mxu0
        %v1130 = vadd.f32 %v905, %v1129
        %v1131 = vpop.f32.mrb[0].mxu0
        %1132 = vmatprep.mubr.bf16.mxu0 0
        %1133 = vmatmul.mubr.bf16.gmra.mrb[0].mxu0 %v978
        %v1134 = vpop.f32.mrb[0].mxu0
        %v1135 = vadd.f32 %v905, %v1134
        %v1136 = vpop.f32.mrb[0].mxu0
        %v1137 = vpop.f32.mrb[0].mxu0
        %v1138 = vadd.f32 %v905, %v1137
        %v1139 = vpop.f32.mrb[0].mxu0
        %1140 = vdwg.mxu0
        %v1141 = vmax.f32 %v1015, 0.0
        %v1142 = vmax.f32 %v1018, 0.0
        %v1143 = vmax.f32 %v1023, 0.0
        %v1144 = vmax.f32 %v1026, 0.0
        %v1145 = vmax.f32 %v1031, 0.0
        %v1146 = vmax.f32 %v1034, 0.0
        %v1147 = vmax.f32 %v1039, 0.0
        %v1148 = vmax.f32 %v1042, 0.0
        %v1149 = vmax.f32 %v1047, 0.0
        %v1150 = vmax.f32 %v1050, 0.0
        %v1151 = vmax.f32 %v1055, 0.0
        %v1152 = vmax.f32 %v1058, 0.0
        %v1153 = vmax.f32 %v1063, 0.0
        %v1154 = vmax.f32 %v1066, 0.0
        %v1155 = vmax.f32 %v1071, 0.0
        %v1156 = vmax.f32 %v1074, 0.0
        %v1157 = vmax.f32 %v1079, 0.0
        %v1158 = vmax.f32 %v1082, 0.0
        %v1159 = vmax.f32 %v1087, 0.0
        %v1160 = vmax.f32 %v1090, 0.0
        %v1161 = vmax.f32 %v1095, 0.0
        %v1162 = vmax.f32 %v1098, 0.0
        %v1163 = vmax.f32 %v1103, 0.0
        %v1164 = vmax.f32 %v1106, 0.0
        %v1165 = vmax.f32 %v1111, 0.0
        %v1166 = vmax.f32 %v1114, 0.0
        %v1167 = vmax.f32 %v1119, 0.0
        %v1168 = vmax.f32 %v1122, 0.0
        %v1169 = vmax.f32 %v1127, 0.0
        %v1170 = vmax.f32 %v1130, 0.0
        %v1171 = vmax.f32 %v1135, 0.0
        %v1172 = vmax.f32 %v1138, 0.0
        %v1173 = vpack.c.bf16 %v1142, %v1141
        %v1174 = vpack.c.bf16 %v1144, %v1143
        %v1175 = vpack.c.bf16 %v1146, %v1145
        %v1176 = vpack.c.bf16 %v1148, %v1147
        %v1177 = vpack.c.bf16 %v1150, %v1149
        %v1178 = vpack.c.bf16 %v1152, %v1151
        %v1179 = vpack.c.bf16 %v1154, %v1153
        %v1180 = vpack.c.bf16 %v1156, %v1155
        %v1181 = vpack.c.bf16 %v1158, %v1157
        %v1182 = vpack.c.bf16 %v1160, %v1159
        %v1183 = vpack.c.bf16 %v1162, %v1161
        %v1184 = vpack.c.bf16 %v1164, %v1163
        %v1185 = vpack.c.bf16 %v1166, %v1165
        %v1186 = vpack.c.bf16 %v1168, %v1167
        %v1187 = vpack.c.bf16 %v1170, %v1169
        %v1188 = vpack.c.bf16 %v1172, %v1171
        %v1189 = vld [vmem:[%s6] sm:$0xf]
        %v1190 = vld [vmem:[%s6 + $0x4] sm:$0xf]
        %v1191 = vld [vmem:[%s6 + $0x8] sm:$0xf]
        %v1192 = vld [vmem:[%s6 + $0xc] sm:$0xf]
        %v1193 = vld [vmem:[%s6 + $0x10] sm:$0xf]
        %v1194 = vld [vmem:[%s6 + $0x14] sm:$0xf]
        %v1195 = vld [vmem:[%s6 + $0x18] sm:$0xf]
        %v1196 = vld [vmem:[%s6 + $0x1c] sm:$0xf]
        %v1197 = vld [vmem:[%s7] sm:$0x1]
        %v1199 = vlaneseq
        %v1200 = vshrl.u32 %v1199, 7
        %v1201 = vsub.s32 0, %v1200
        %v1202 = vrot.slane %v1197, %v1201
        %v1212 = vunpack.c.l.b16 %v1189
        %v1213 = vunpack.c.l.b16 %v1190
        %v1214 = vunpack.c.l.b16 %v1191
        %v1215 = vunpack.c.l.b16 %v1192
        %v1216 = vunpack.c.l.b16 %v1193
        %v1217 = vunpack.c.l.b16 %v1194
        %v1218 = vunpack.c.l.b16 %v1195
        %v1219 = vunpack.c.l.b16 %v1196
        %v1220 = vpack.c.b16 %v1213, %v1212
        %v1221 = vpack.c.b16 %v1215, %v1214
        %v1222 = vpack.c.b16 %v1217, %v1216
        %v1223 = vpack.c.b16 %v1219, %v1218
        %v1229 = vsel %vm931, %v1173, 0
        %v1232 = vsel %vm931, %v1174, 0
        %v1235 = vsel %vm931, %v1175, 0
        %v1238 = vsel %vm931, %v1176, 0
        %v1241 = vsel %vm931, %v1177, 0
        %v1244 = vsel %vm931, %v1178, 0
        %v1247 = vsel %vm931, %v1179, 0
        %v1250 = vsel %vm931, %v1180, 0
        %v1253 = vsel %vm931, %v1181, 0
        %v1256 = vsel %vm931, %v1182, 0
        %v1259 = vsel %vm931, %v1183, 0
        %v1262 = vsel %vm931, %v1184, 0
        %v1265 = vsel %vm931, %v1185, 0
        %v1268 = vsel %vm931, %v1186, 0
        %v1271 = vsel %vm931, %v1187, 0
        %v1274 = vsel %vm931, %v1188, 0
        %1276 = vmatprep.subr.bf16.mxu0 0
        %1277 = vmatpush1.bf16.msra.mxu0 %v1220
        %1278 = vmatprep.subr.bf16.mxu0 0
        %1279 = vmatpush1.bf16.msra.mxu0 %v1221
        %1280 = vmatprep.subr.bf16.mxu0 0
        %1281 = vmatpush1.bf16.msra.mxu0 %v1222
        %1282 = vmatprep.subr.bf16.mxu0 0
        %1283 = vmatpush1.bf16.msra.mxu0 %v1223
        %1284 = vmatprep.subr.bf16.mxu0 0
        %1285 = vmatpush1.bf16.msra.mxu0 0
        %1286 = vmatprep.subr.bf16.mxu0 0
        %1287 = vmatpush1.bf16.msra.mxu0 0
        %1288 = vmatprep.subr.bf16.mxu0 0
        %1289 = vmatpush1.bf16.msra.mxu0 0
        %1290 = vmatprep.subr.bf16.mxu0 0
        %1291 = vmatpush1.bf16.msra.mxu0 0
        %1292 = vmatprep.subr.bf16.mxu0 0
        %1293 = vmatpush1.bf16.msra.mxu0 0
        %1294 = vmatprep.subr.bf16.mxu0 0
        %1295 = vmatpush1.bf16.msra.mxu0 0
        %1296 = vmatprep.subr.bf16.mxu0 0
        %1297 = vmatpush1.bf16.msra.mxu0 0
        %1298 = vmatprep.subr.bf16.mxu0 0
        %1299 = vmatpush1.bf16.msra.mxu0 0
        %1300 = vmatprep.subr.bf16.mxu0 0
        %1301 = vmatpush1.bf16.msra.mxu0 0
        %1302 = vmatprep.subr.bf16.mxu0 0
        %1303 = vmatpush1.bf16.msra.mxu0 0
        %1304 = vmatprep.subr.bf16.mxu0 0
        %1305 = vmatpush1.bf16.msra.mxu0 0
        %1306 = vmatprep.subr.bf16.mxu0 0
        %1307 = vmatpush1.bf16.msra.mxu0 0
        %1308 = vmatprep.mubr.bf16.mxu0 0
        %1309 = vmatmul.mubr.bf16.gmra.mrb[0].mxu0 %v1229
        %v1310 = vpop.f32.mrb[0].mxu0
        %v1311 = vadd.f32 %v1202, %v1310
        %v1312 = vpop.f32.mrb[0].mxu0
        %v1313 = vpop.f32.mrb[0].mxu0
        %v1314 = vadd.f32 %v1202, %v1313
        %v1315 = vpop.f32.mrb[0].mxu0
        %1316 = vmatprep.mubr.bf16.mxu0 0
        %1317 = vmatmul.mubr.bf16.gmra.mrb[0].mxu0 %v1232
        %v1318 = vpop.f32.mrb[0].mxu0
        %v1319 = vadd.f32 %v1202, %v1318
        %v1320 = vpop.f32.mrb[0].mxu0
        %v1321 = vpop.f32.mrb[0].mxu0
        %v1322 = vadd.f32 %v1202, %v1321
        %v1323 = vpop.f32.mrb[0].mxu0
        %1324 = vmatprep.mubr.bf16.mxu0 0
        %1325 = vmatmul.mubr.bf16.gmra.mrb[0].mxu0 %v1235
        %v1326 = vpop.f32.mrb[0].mxu0
        %v1327 = vadd.f32 %v1202, %v1326
        %v1328 = vpop.f32.mrb[0].mxu0
        %v1329 = vpop.f32.mrb[0].mxu0
        %v1330 = vadd.f32 %v1202, %v1329
        %v1331 = vpop.f32.mrb[0].mxu0
        %1332 = vmatprep.mubr.bf16.mxu0 0
        %1333 = vmatmul.mubr.bf16.gmra.mrb[0].mxu0 %v1238
        %v1334 = vpop.f32.mrb[0].mxu0
        %v1335 = vadd.f32 %v1202, %v1334
        %v1336 = vpop.f32.mrb[0].mxu0
        %v1337 = vpop.f32.mrb[0].mxu0
        %v1338 = vadd.f32 %v1202, %v1337
        %v1339 = vpop.f32.mrb[0].mxu0
        %1340 = vmatprep.mubr.bf16.mxu0 0
        %1341 = vmatmul.mubr.bf16.gmra.mrb[0].mxu0 %v1241
        %v1342 = vpop.f32.mrb[0].mxu0
        %v1343 = vadd.f32 %v1202, %v1342
        %v1344 = vpop.f32.mrb[0].mxu0
        %v1345 = vpop.f32.mrb[0].mxu0
        %v1346 = vadd.f32 %v1202, %v1345
        %v1347 = vpop.f32.mrb[0].mxu0
        %1348 = vmatprep.mubr.bf16.mxu0 0
        %1349 = vmatmul.mubr.bf16.gmra.mrb[0].mxu0 %v1244
        %v1350 = vpop.f32.mrb[0].mxu0
        %v1351 = vadd.f32 %v1202, %v1350
        %v1352 = vpop.f32.mrb[0].mxu0
        %v1353 = vpop.f32.mrb[0].mxu0
        %v1354 = vadd.f32 %v1202, %v1353
        %v1355 = vpop.f32.mrb[0].mxu0
        %1356 = vmatprep.mubr.bf16.mxu0 0
        %1357 = vmatmul.mubr.bf16.gmra.mrb[0].mxu0 %v1247
        %v1358 = vpop.f32.mrb[0].mxu0
        %v1359 = vadd.f32 %v1202, %v1358
        %v1360 = vpop.f32.mrb[0].mxu0
        %v1361 = vpop.f32.mrb[0].mxu0
        %v1362 = vadd.f32 %v1202, %v1361
        %v1363 = vpop.f32.mrb[0].mxu0
        %1364 = vmatprep.mubr.bf16.mxu0 0
        %1365 = vmatmul.mubr.bf16.gmra.mrb[0].mxu0 %v1250
        %v1366 = vpop.f32.mrb[0].mxu0
        %v1367 = vadd.f32 %v1202, %v1366
        %v1368 = vpop.f32.mrb[0].mxu0
        %v1369 = vpop.f32.mrb[0].mxu0
        %v1370 = vadd.f32 %v1202, %v1369
        %v1371 = vpop.f32.mrb[0].mxu0
        %1372 = vmatprep.mubr.bf16.mxu0 0
        %1373 = vmatmul.mubr.bf16.gmra.mrb[0].mxu0 %v1253
        %v1374 = vpop.f32.mrb[0].mxu0
        %v1375 = vadd.f32 %v1202, %v1374
        %v1376 = vpop.f32.mrb[0].mxu0
        %v1377 = vpop.f32.mrb[0].mxu0
        %v1378 = vadd.f32 %v1202, %v1377
        %v1379 = vpop.f32.mrb[0].mxu0
        %1380 = vmatprep.mubr.bf16.mxu0 0
        %1381 = vmatmul.mubr.bf16.gmra.mrb[0].mxu0 %v1256
        %v1382 = vpop.f32.mrb[0].mxu0
        %v1383 = vadd.f32 %v1202, %v1382
        %v1384 = vpop.f32.mrb[0].mxu0
        %v1385 = vpop.f32.mrb[0].mxu0
        %v1386 = vadd.f32 %v1202, %v1385
        %v1387 = vpop.f32.mrb[0].mxu0
        %1388 = vmatprep.mubr.bf16.mxu0 0
        %1389 = vmatmul.mubr.bf16.gmra.mrb[0].mxu0 %v1259
        %v1390 = vpop.f32.mrb[0].mxu0
        %v1391 = vadd.f32 %v1202, %v1390
        %v1392 = vpop.f32.mrb[0].mxu0
        %v1393 = vpop.f32.mrb[0].mxu0
        %v1394 = vadd.f32 %v1202, %v1393
        %v1395 = vpop.f32.mrb[0].mxu0
        %1396 = vmatprep.mubr.bf16.mxu0 0
        %1397 = vmatmul.mubr.bf16.gmra.mrb[0].mxu0 %v1262
        %v1398 = vpop.f32.mrb[0].mxu0
        %v1399 = vadd.f32 %v1202, %v1398
        %v1400 = vpop.f32.mrb[0].mxu0
        %v1401 = vpop.f32.mrb[0].mxu0
        %v1402 = vadd.f32 %v1202, %v1401
        %v1403 = vpop.f32.mrb[0].mxu0
        %1404 = vmatprep.mubr.bf16.mxu0 0
        %1405 = vmatmul.mubr.bf16.gmra.mrb[0].mxu0 %v1265
        %v1406 = vpop.f32.mrb[0].mxu0
        %v1407 = vadd.f32 %v1202, %v1406
        %v1408 = vpop.f32.mrb[0].mxu0
        %v1409 = vpop.f32.mrb[0].mxu0
        %v1410 = vadd.f32 %v1202, %v1409
        %v1411 = vpop.f32.mrb[0].mxu0
        %1412 = vmatprep.mubr.bf16.mxu0 0
        %1413 = vmatmul.mubr.bf16.gmra.mrb[0].mxu0 %v1268
        %v1414 = vpop.f32.mrb[0].mxu0
        %v1415 = vadd.f32 %v1202, %v1414
        %v1416 = vpop.f32.mrb[0].mxu0
        %v1417 = vpop.f32.mrb[0].mxu0
        %v1418 = vadd.f32 %v1202, %v1417
        %v1419 = vpop.f32.mrb[0].mxu0
        %1420 = vmatprep.mubr.bf16.mxu0 0
        %1421 = vmatmul.mubr.bf16.gmra.mrb[0].mxu0 %v1271
        %v1422 = vpop.f32.mrb[0].mxu0
        %v1423 = vadd.f32 %v1202, %v1422
        %v1424 = vpop.f32.mrb[0].mxu0
        %v1425 = vpop.f32.mrb[0].mxu0
        %v1426 = vadd.f32 %v1202, %v1425
        %v1427 = vpop.f32.mrb[0].mxu0
        %1428 = vmatprep.mubr.bf16.mxu0 0
        %1429 = vmatmul.mubr.bf16.gmra.mrb[0].mxu0 %v1274
        %v1430 = vpop.f32.mrb[0].mxu0
        %v1431 = vadd.f32 %v1202, %v1430
        %v1432 = vpop.f32.mrb[0].mxu0
        %v1433 = vpop.f32.mrb[0].mxu0
        %v1434 = vadd.f32 %v1202, %v1433
        %v1435 = vpop.f32.mrb[0].mxu0
        %1436 = vdwg.mxu0
        %1437 = vst.msk [vmem:[%s335] sm:$0xff] %vm931, %v1311
        %1438 = vst.msk [vmem:[%s335 + $0x8] sm:$0xff] %vm931, %v1314
        %1439 = vst.msk [vmem:[%s335 + $0x10] sm:$0xff] %vm931, %v1319
        %1440 = vst.msk [vmem:[%s335 + $0x18] sm:$0xff] %vm931, %v1322
        %1441 = vst.msk [vmem:[%s335 + $0x20] sm:$0xff] %vm931, %v1327
        %1442 = vst.msk [vmem:[%s335 + $0x28] sm:$0xff] %vm931, %v1330
        %1443 = vst.msk [vmem:[%s335 + $0x30] sm:$0xff] %vm931, %v1335
        %1444 = vst.msk [vmem:[%s335 + $0x38] sm:$0xff] %vm931, %v1338
        %1445 = vst.msk [vmem:[%s335 + $0x40] sm:$0xff] %vm931, %v1343
        %1446 = vst.msk [vmem:[%s335 + $0x48] sm:$0xff] %vm931, %v1346
        %1447 = vst.msk [vmem:[%s335 + $0x50] sm:$0xff] %vm931, %v1351
        %1448 = vst.msk [vmem:[%s335 + $0x58] sm:$0xff] %vm931, %v1354
        %1449 = vst.msk [vmem:[%s335 + $0x60] sm:$0xff] %vm931, %v1359
        %1450 = vst.msk [vmem:[%s335 + $0x68] sm:$0xff] %vm931, %v1362
        %1451 = vst.msk [vmem:[%s335 + $0x70] sm:$0xff] %vm931, %v1367
        %1452 = vst.msk [vmem:[%s335 + $0x78] sm:$0xff] %vm931, %v1370
        %1453 = vst.msk [vmem:[%s335 + $0x80] sm:$0xff] %vm931, %v1375
        %1454 = vst.msk [vmem:[%s335 + $0x88] sm:$0xff] %vm931, %v1378
        %1455 = vst.msk [vmem:[%s335 + $0x90] sm:$0xff] %vm931, %v1383
        %1456 = vst.msk [vmem:[%s335 + $0x98] sm:$0xff] %vm931, %v1386
        %1457 = vst.msk [vmem:[%s335 + $0xa0] sm:$0xff] %vm931, %v1391
        %1458 = vst.msk [vmem:[%s335 + $0xa8] sm:$0xff] %vm931, %v1394
        %1459 = vst.msk [vmem:[%s335 + $0xb0] sm:$0xff] %vm931, %v1399
        %1460 = vst.msk [vmem:[%s335 + $0xb8] sm:$0xff] %vm931, %v1402
        %1461 = vst.msk [vmem:[%s335 + $0xc0] sm:$0xff] %vm931, %v1407
        %1462 = vst.msk [vmem:[%s335 + $0xc8] sm:$0xff] %vm931, %v1410
        %1463 = vst.msk [vmem:[%s335 + $0xd0] sm:$0xff] %vm931, %v1415
        %1464 = vst.msk [vmem:[%s335 + $0xd8] sm:$0xff] %vm931, %v1418
        %1465 = vst.msk [vmem:[%s335 + $0xe0] sm:$0xff] %vm931, %v1423
        %1466 = vst.msk [vmem:[%s335 + $0xe8] sm:$0xff] %vm931, %v1426
        %1467 = vst.msk [vmem:[%s335 + $0xf0] sm:$0xff] %vm931, %v1431
        %1468 = vst.msk [vmem:[%s335 + $0xf8] sm:$0xff] %vm931, %v1434
        %s1469 = sand.u32 %s205, 1
        %s1470 = sand.u32 %s205, 1
        %s1471 = smul.addr %s1470, 256
        %s1472 = scalar_lea.vmem [#allocation2], %s1471
        // Predicated region
        $region53: #{tpu_custom_call.1} parent=51 // pred_check
          %p1473 = pneg %p215
        $region54: #{tpu_custom_call.1} parent=51 // pred_check_branch
          %1475 = sbr.rel (%p1473) target = $region56
        $region55: #{tpu_custom_call.1} parent=51 // pred_region
          %s1476 = smul.u32 32, %s19
          %s1477 = ssub.s32 125, %s1476
          %p1478 = scmp.lt.s32.totalorder %s1477, 32
          %s1479 = scalar_select %p1478, %s1477, 32
          %s1480 = smul.u32 128, %s1479
          %p1481 = scmp.ne.s32.totalorder 0, %s1480
          %s1482 = smul.addr %s1476, 8
          %s1483 = scalar_lea.vmem %s8, %s1482
          // Predicated region
          $region57: #{tpu_custom_call.1} parent=55 // pred_check
            %p1484 = pneg %p1481
          $region58: #{tpu_custom_call.1} parent=55 // pred_check_branch
            %1486 = sbr.rel (%p1484) target = $region60
          $region59: #{tpu_custom_call.1} parent=55 // pred_region
            // Predicated region
            $region61: #{tpu_custom_call.1} parent=59 // pred_check
              _
            $region62: #{tpu_custom_call.1} parent=59 // pred_check_branch
              %1488 = sbr.rel (0) target = $region64
            $region63: #{tpu_custom_call.1} parent=59 // pred_region
              // Predicated region
              $region83: #{tpu_custom_call.1} parent=63 // pred_check
                _
              $region84: #{tpu_custom_call.1} parent=63 // pred_check_branch
                %1599 = sbr.rel (0) target = $region86
              $region85: #{tpu_custom_call.1} parent=63 // pred_region
                %s1600 = sshrl.u32 %s1479, 5
                // While loop
                $region87: #{tpu_custom_call.1} parent=85 // loop_pre_header
                  _
                $region88: #{tpu_custom_call.1} parent=85 // loop_header
                  %s1602 = sphi 0, %s1604
                  %p1603 = scmp.ge.s32.totalorder %s1602, %s1600
                  %s1607 = sphi 0, %s1676
                  %s1608 = sphi %s1472, %s1679
                  %s1609 = sphi %s1483, %s1680
                $region89: #{tpu_custom_call.1} parent=85 // loop_header_branch
                  %1606 = sbr.rel (%p1603) target = $region93
                $region90: #{tpu_custom_call.1} parent=85 // loop_body
                  %v1610 = vld [vmem:[%s1608] sm:$0xff]
                  %1611 = vst [vmem:[%s1609] sm:$0xff] %v1610
                  %v1612 = vld [vmem:[%s1608 + $0x8] sm:$0xff]
                  %1613 = vst [vmem:[%s1609 + $0x8] sm:$0xff] %v1612
                  %v1614 = vld [vmem:[%s1608 + $0x10] sm:$0xff]
                  %1615 = vst [vmem:[%s1609 + $0x10] sm:$0xff] %v1614
                  %v1616 = vld [vmem:[%s1608 + $0x18] sm:$0xff]
                  %1617 = vst [vmem:[%s1609 + $0x18] sm:$0xff] %v1616
                  %v1618 = vld [vmem:[%s1608 + $0x20] sm:$0xff]
                  %1619 = vst [vmem:[%s1609 + $0x20] sm:$0xff] %v1618
                  %v1620 = vld [vmem:[%s1608 + $0x28] sm:$0xff]
                  %1621 = vst [vmem:[%s1609 + $0x28] sm:$0xff] %v1620
                  %v1622 = vld [vmem:[%s1608 + $0x30] sm:$0xff]
                  %1623 = vst [vmem:[%s1609 + $0x30] sm:$0xff] %v1622
                  %v1624 = vld [vmem:[%s1608 + $0x38] sm:$0xff]
                  %1625 = vst [vmem:[%s1609 + $0x38] sm:$0xff] %v1624
                  %v1626 = vld [vmem:[%s1608 + $0x40] sm:$0xff]
                  %1627 = vst [vmem:[%s1609 + $0x40] sm:$0xff] %v1626
                  %v1628 = vld [vmem:[%s1608 + $0x48] sm:$0xff]
                  %1629 = vst [vmem:[%s1609 + $0x48] sm:$0xff] %v1628
                  %v1630 = vld [vmem:[%s1608 + $0x50] sm:$0xff]
                  %1631 = vst [vmem:[%s1609 + $0x50] sm:$0xff] %v1630
                  %v1632 = vld [vmem:[%s1608 + $0x58] sm:$0xff]
                  %1633 = vst [vmem:[%s1609 + $0x58] sm:$0xff] %v1632
                  %v1634 = vld [vmem:[%s1608 + $0x60] sm:$0xff]
                  %1635 = vst [vmem:[%s1609 + $0x60] sm:$0xff] %v1634
                  %v1636 = vld [vmem:[%s1608 + $0x68] sm:$0xff]
                  %1637 = vst [vmem:[%s1609 + $0x68] sm:$0xff] %v1636
                  %v1638 = vld [vmem:[%s1608 + $0x70] sm:$0xff]
                  %1639 = vst [vmem:[%s1609 + $0x70] sm:$0xff] %v1638
                  %v1640 = vld [vmem:[%s1608 + $0x78] sm:$0xff]
                  %1641 = vst [vmem:[%s1609 + $0x78] sm:$0xff] %v1640
                  %v1642 = vld [vmem:[%s1608 + $0x80] sm:$0xff]
                  %1643 = vst [vmem:[%s1609 + $0x80] sm:$0xff] %v1642
                  %v1644 = vld [vmem:[%s1608 + $0x88] sm:$0xff]
                  %1645 = vst [vmem:[%s1609 + $0x88] sm:$0xff] %v1644
                  %v1646 = vld [vmem:[%s1608 + $0x90] sm:$0xff]
                  %1647 = vst [vmem:[%s1609 + $0x90] sm:$0xff] %v1646
                  %v1648 = vld [vmem:[%s1608 + $0x98] sm:$0xff]
                  %1649 = vst [vmem:[%s1609 + $0x98] sm:$0xff] %v1648
                  %v1650 = vld [vmem:[%s1608 + $0xa0] sm:$0xff]
                  %1651 = vst [vmem:[%s1609 + $0xa0] sm:$0xff] %v1650
                  %v1652 = vld [vmem:[%s1608 + $0xa8] sm:$0xff]
                  %1653 = vst [vmem:[%s1609 + $0xa8] sm:$0xff] %v1652
                  %v1654 = vld [vmem:[%s1608 + $0xb0] sm:$0xff]
                  %1655 = vst [vmem:[%s1609 + $0xb0] sm:$0xff] %v1654
                  %v1656 = vld [vmem:[%s1608 + $0xb8] sm:$0xff]
                  %1657 = vst [vmem:[%s1609 + $0xb8] sm:$0xff] %v1656
                  %v1658 = vld [vmem:[%s1608 + $0xc0] sm:$0xff]
                  %1659 = vst [vmem:[%s1609 + $0xc0] sm:$0xff] %v1658
                  %v1660 = vld [vmem:[%s1608 + $0xc8] sm:$0xff]
                  %1661 = vst [vmem:[%s1609 + $0xc8] sm:$0xff] %v1660
                  %v1662 = vld [vmem:[%s1608 + $0xd0] sm:$0xff]
                  %1663 = vst [vmem:[%s1609 + $0xd0] sm:$0xff] %v1662
                  %v1664 = vld [vmem:[%s1608 + $0xd8] sm:$0xff]
                  %1665 = vst [vmem:[%s1609 + $0xd8] sm:$0xff] %v1664
                  %v1666 = vld [vmem:[%s1608 + $0xe0] sm:$0xff]
                  %1667 = vst [vmem:[%s1609 + $0xe0] sm:$0xff] %v1666
                  %v1668 = vld [vmem:[%s1608 + $0xe8] sm:$0xff]
                  %1669 = vst [vmem:[%s1609 + $0xe8] sm:$0xff] %v1668
                  %v1670 = vld [vmem:[%s1608 + $0xf0] sm:$0xff]
                  %1671 = vst [vmem:[%s1609 + $0xf0] sm:$0xff] %v1670
                  %v1672 = vld [vmem:[%s1608 + $0xf8] sm:$0xff]
                  %1673 = vst [vmem:[%s1609 + $0xf8] sm:$0xff] %v1672
                  %s1674 = sadd.s32 1, %s1607
                  %p1675 = scmp.ge.s32.totalorder %s1674, %s1600
                  %s1676 = scalar_select %p1675, 0, %s1674
                  %s1677 = smul.u32 %s1676, 256
                  %s1678 = smul.u32 %s1676, 256
                  %s1679 = scalar_lea.vmem %s1472, %s1677 [#allocation2]
                  %s1680 = scalar_lea.vmem %s1483, %s1678
                $region91: #{tpu_custom_call.1} parent=85 // loop_footer
                  %s1604 = sadd.s32 %s1602, 1
                $region92: #{tpu_custom_call.1} parent=85 // loop_footer_branch
                  %1601 = sbr.rel target = $region88
                $region93: #{tpu_custom_call.1} parent=85 // loop_exit
                  _
                %s1681 = sshrl.u32 %s1479, 5
                %s1682 = sand.u32 %s1479, 31
                %s1683 = smul.u32 %s1681, 32
                %s1684 = smul.u32 8, %s1683
                %s1685 = scalar_lea.vmem %s1472, %s1684 [#allocation2]
                %s1686 = smul.u32 8, %s1683
                %s1687 = scalar_lea.vmem %s1483, %s1686
                // While loop
                $region94: #{tpu_custom_call.1} parent=85 // loop_pre_header
                  _
                $region95: #{tpu_custom_call.1} parent=85 // loop_header
                  %s1689 = sphi 0, %s1691
                  %p1690 = scmp.ge.s32.totalorder %s1689, %s1682
                  %s1694 = sphi 0, %s1701
                  %s1695 = sphi %s1685, %s1704
                  %s1696 = sphi %s1687, %s1705
                $region96: #{tpu_custom_call.1} parent=85 // loop_header_branch
                  %1693 = sbr.rel (%p1690) target = $region100
                $region97: #{tpu_custom_call.1} parent=85 // loop_body
                  %v1697 = vld [vmem:[%s1695] sm:$0xff]
                  %1698 = vst [vmem:[%s1696] sm:$0xff] %v1697
                  %s1699 = sadd.s32 1, %s1694
                  %p1700 = scmp.ge.s32.totalorder %s1699, %s1682
                  %s1701 = scalar_select %p1700, 0, %s1699
                  %s1702 = smul.u32 %s1701, 8
                  %s1703 = smul.u32 %s1701, 8
                  %s1704 = scalar_lea.vmem %s1685, %s1702 [#allocation2]
                  %s1705 = scalar_lea.vmem %s1687, %s1703
                $region98: #{tpu_custom_call.1} parent=85 // loop_footer
                  %s1691 = sadd.s32 %s1689, 1
                $region99: #{tpu_custom_call.1} parent=85 // loop_footer_branch
                  %1688 = sbr.rel target = $region95
                $region100: #{tpu_custom_call.1} parent=85 // loop_exit
                  _
              $region86: #{tpu_custom_call.1} parent=63 // pred_fallthru
                _
              // Predicated region
              $region101: #{tpu_custom_call.1} parent=63 // pred_check
                _
              $region102: #{tpu_custom_call.1} parent=63 // pred_check_branch
                %1707 = sbr.rel target = $region104
              $region103: #{tpu_custom_call.1} parent=63 // pred_region
                _
              $region104: #{tpu_custom_call.1} parent=63 // pred_fallthru
                _
            $region64: #{tpu_custom_call.1} parent=59 // pred_fallthru
              _
            // Predicated region
            $region65: #{tpu_custom_call.1} parent=59 // pred_check
              _
            $region66: #{tpu_custom_call.1} parent=59 // pred_check_branch
              %1490 = sbr.rel target = $region68
            $region67: #{tpu_custom_call.1} parent=59 // pred_region
              %s1492 = sshrl.u32 %s1479, 5
              // While loop
              $region69: #{tpu_custom_call.1} parent=67 // loop_pre_header
                _
              $region70: #{tpu_custom_call.1} parent=67 // loop_header
                %s1494 = sphi 0, %s1496
                %p1495 = scmp.ge.s32.totalorder %s1494, %s1492
                %s1499 = sphi 0, %s1568
                %s1500 = sphi %s1472, %s1571
                %s1501 = sphi %s1483, %s1572
              $region71: #{tpu_custom_call.1} parent=67 // loop_header_branch
                %1498 = sbr.rel (%p1495) target = $region75
              $region72: #{tpu_custom_call.1} parent=67 // loop_body
                %v1502 = vld [vmem:[%s1500] sm:$0xff]
                %1503 = vst [vmem:[%s1501] sm:$0xff] %v1502
                %v1504 = vld [vmem:[%s1500 + $0x8] sm:$0xff]
                %1505 = vst [vmem:[%s1501 + $0x8] sm:$0xff] %v1504
                %v1506 = vld [vmem:[%s1500 + $0x10] sm:$0xff]
                %1507 = vst [vmem:[%s1501 + $0x10] sm:$0xff] %v1506
                %v1508 = vld [vmem:[%s1500 + $0x18] sm:$0xff]
                %1509 = vst [vmem:[%s1501 + $0x18] sm:$0xff] %v1508
                %v1510 = vld [vmem:[%s1500 + $0x20] sm:$0xff]
                %1511 = vst [vmem:[%s1501 + $0x20] sm:$0xff] %v1510
                %v1512 = vld [vmem:[%s1500 + $0x28] sm:$0xff]
                %1513 = vst [vmem:[%s1501 + $0x28] sm:$0xff] %v1512
                %v1514 = vld [vmem:[%s1500 + $0x30] sm:$0xff]
                %1515 = vst [vmem:[%s1501 + $0x30] sm:$0xff] %v1514
                %v1516 = vld [vmem:[%s1500 + $0x38] sm:$0xff]
                %1517 = vst [vmem:[%s1501 + $0x38] sm:$0xff] %v1516
                %v1518 = vld [vmem:[%s1500 + $0x40] sm:$0xff]
                %1519 = vst [vmem:[%s1501 + $0x40] sm:$0xff] %v1518
                %v1520 = vld [vmem:[%s1500 + $0x48] sm:$0xff]
                %1521 = vst [vmem:[%s1501 + $0x48] sm:$0xff] %v1520
                %v1522 = vld [vmem:[%s1500 + $0x50] sm:$0xff]
                %1523 = vst [vmem:[%s1501 + $0x50] sm:$0xff] %v1522
                %v1524 = vld [vmem:[%s1500 + $0x58] sm:$0xff]
                %1525 = vst [vmem:[%s1501 + $0x58] sm:$0xff] %v1524
                %v1526 = vld [vmem:[%s1500 + $0x60] sm:$0xff]
                %1527 = vst [vmem:[%s1501 + $0x60] sm:$0xff] %v1526
                %v1528 = vld [vmem:[%s1500 + $0x68] sm:$0xff]
                %1529 = vst [vmem:[%s1501 + $0x68] sm:$0xff] %v1528
                %v1530 = vld [vmem:[%s1500 + $0x70] sm:$0xff]
                %1531 = vst [vmem:[%s1501 + $0x70] sm:$0xff] %v1530
                %v1532 = vld [vmem:[%s1500 + $0x78] sm:$0xff]
                %1533 = vst [vmem:[%s1501 + $0x78] sm:$0xff] %v1532
                %v1534 = vld [vmem:[%s1500 + $0x80] sm:$0xff]
                %1535 = vst [vmem:[%s1501 + $0x80] sm:$0xff] %v1534
                %v1536 = vld [vmem:[%s1500 + $0x88] sm:$0xff]
                %1537 = vst [vmem:[%s1501 + $0x88] sm:$0xff] %v1536
                %v1538 = vld [vmem:[%s1500 + $0x90] sm:$0xff]
                %1539 = vst [vmem:[%s1501 + $0x90] sm:$0xff] %v1538
                %v1540 = vld [vmem:[%s1500 + $0x98] sm:$0xff]
                %1541 = vst [vmem:[%s1501 + $0x98] sm:$0xff] %v1540
                %v1542 = vld [vmem:[%s1500 + $0xa0] sm:$0xff]
                %1543 = vst [vmem:[%s1501 + $0xa0] sm:$0xff] %v1542
                %v1544 = vld [vmem:[%s1500 + $0xa8] sm:$0xff]
                %1545 = vst [vmem:[%s1501 + $0xa8] sm:$0xff] %v1544
                %v1546 = vld [vmem:[%s1500 + $0xb0] sm:$0xff]
                %1547 = vst [vmem:[%s1501 + $0xb0] sm:$0xff] %v1546
                %v1548 = vld [vmem:[%s1500 + $0xb8] sm:$0xff]
                %1549 = vst [vmem:[%s1501 + $0xb8] sm:$0xff] %v1548
                %v1550 = vld [vmem:[%s1500 + $0xc0] sm:$0xff]
                %1551 = vst [vmem:[%s1501 + $0xc0] sm:$0xff] %v1550
                %v1552 = vld [vmem:[%s1500 + $0xc8] sm:$0xff]
                %1553 = vst [vmem:[%s1501 + $0xc8] sm:$0xff] %v1552
                %v1554 = vld [vmem:[%s1500 + $0xd0] sm:$0xff]
                %1555 = vst [vmem:[%s1501 + $0xd0] sm:$0xff] %v1554
                %v1556 = vld [vmem:[%s1500 + $0xd8] sm:$0xff]
                %1557 = vst [vmem:[%s1501 + $0xd8] sm:$0xff] %v1556
                %v1558 = vld [vmem:[%s1500 + $0xe0] sm:$0xff]
                %1559 = vst [vmem:[%s1501 + $0xe0] sm:$0xff] %v1558
                %v1560 = vld [vmem:[%s1500 + $0xe8] sm:$0xff]
                %1561 = vst [vmem:[%s1501 + $0xe8] sm:$0xff] %v1560
                %v1562 = vld [vmem:[%s1500 + $0xf0] sm:$0xff]
                %1563 = vst [vmem:[%s1501 + $0xf0] sm:$0xff] %v1562
                %v1564 = vld [vmem:[%s1500 + $0xf8] sm:$0xff]
                %1565 = vst [vmem:[%s1501 + $0xf8] sm:$0xff] %v1564
                %s1566 = sadd.s32 1, %s1499
                %p1567 = scmp.ge.s32.totalorder %s1566, %s1492
                %s1568 = scalar_select %p1567, 0, %s1566
                %s1569 = smul.u32 %s1568, 256
                %s1570 = smul.u32 %s1568, 256
                %s1571 = scalar_lea.vmem %s1472, %s1569 [#allocation2]
                %s1572 = scalar_lea.vmem %s1483, %s1570
              $region73: #{tpu_custom_call.1} parent=67 // loop_footer
                %s1496 = sadd.s32 %s1494, 1
              $region74: #{tpu_custom_call.1} parent=67 // loop_footer_branch
                %1493 = sbr.rel target = $region70
              $region75: #{tpu_custom_call.1} parent=67 // loop_exit
                _
              %s1573 = sshrl.u32 %s1479, 5
              %s1574 = sand.u32 %s1479, 31
              %s1575 = smul.u32 %s1573, 32
              %s1576 = smul.u32 8, %s1575
              %s1577 = scalar_lea.vmem %s1472, %s1576 [#allocation2]
              %s1578 = smul.u32 8, %s1575
              %s1579 = scalar_lea.vmem %s1483, %s1578
              // While loop
              $region76: #{tpu_custom_call.1} parent=67 // loop_pre_header
                _
              $region77: #{tpu_custom_call.1} parent=67 // loop_header
                %s1581 = sphi 0, %s1583
                %p1582 = scmp.ge.s32.totalorder %s1581, %s1574
                %s1586 = sphi 0, %s1593
                %s1587 = sphi %s1577, %s1596
                %s1588 = sphi %s1579, %s1597
              $region78: #{tpu_custom_call.1} parent=67 // loop_header_branch
                %1585 = sbr.rel (%p1582) target = $region82
              $region79: #{tpu_custom_call.1} parent=67 // loop_body
                %v1589 = vld [vmem:[%s1587] sm:$0xff]
                %1590 = vst [vmem:[%s1588] sm:$0xff] %v1589
                %s1591 = sadd.s32 1, %s1586
                %p1592 = scmp.ge.s32.totalorder %s1591, %s1574
                %s1593 = scalar_select %p1592, 0, %s1591
                %s1594 = smul.u32 %s1593, 8
                %s1595 = smul.u32 %s1593, 8
                %s1596 = scalar_lea.vmem %s1577, %s1594 [#allocation2]
                %s1597 = scalar_lea.vmem %s1579, %s1595
              $region80: #{tpu_custom_call.1} parent=67 // loop_footer
                %s1583 = sadd.s32 %s1581, 1
              $region81: #{tpu_custom_call.1} parent=67 // loop_footer_branch
                %1580 = sbr.rel target = $region77
              $region82: #{tpu_custom_call.1} parent=67 // loop_exit
                _
            $region68: #{tpu_custom_call.1} parent=59 // pred_fallthru
              _
          $region60: #{tpu_custom_call.1} parent=55 // pred_fallthru
            _
          %1708 = vnop
        $region56: #{tpu_custom_call.1} parent=51 // pred_fallthru
          _
      $region52: #{tpu_custom_call.1} parent=5 // pred_fallthru
        _
      %p1709 = scmp.le.s32.totalorder 2, %s14
      // Predicated region
      $region105: #{tpu_custom_call.1} parent=5 // pred_check
        %p1710 = pneg %p1709
      $region106: #{tpu_custom_call.1} parent=5 // pred_check_branch
        %1712 = sbr.rel (%p1710) target = $region108
      $region107: #{tpu_custom_call.1} parent=5 // pred_region
        %s1713 = ssub.s32 %s14, 2
        // Predicated region
        $region109: #{tpu_custom_call.1} parent=107 // pred_check
          %p1714 = pneg %p221
        $region110: #{tpu_custom_call.1} parent=107 // pred_check_branch
          %1716 = sbr.rel (%p1714) target = $region112
        $region111: #{tpu_custom_call.1} parent=107 // pred_region
          %s1717 = sand.u32 %s206, 1
          %s1718 = sand.u32 %s206, 1
          %s1719 = smul.addr %s1718, 256
          %s1720 = scalar_lea.vmem [#allocation2], %s1719
        $region112: #{tpu_custom_call.1} parent=107 // pred_fallthru
          _
      $region108: #{tpu_custom_call.1} parent=5 // pred_fallthru
        _
    $region6: #{tpu_custom_call.1} parent=1 // loop_footer
      %s18 = sadd.s32 1, %s14
    $region7: #{tpu_custom_call.1} parent=1 // loop_footer_branch
      %13 = sbr.rel target = $region3
    $region8: #{tpu_custom_call.1} parent=1 // loop_exit
      _

</llo_original>
